<compile_context>
chip_gen: v5e
topology: v5e:2x2
jax: 0.10.0
libtpu: 0.0.40
codegen_flags: <defaults>
</compile_context>

<pallas_src>
import functools

import jax
import jax.numpy as jnp
from jax import lax
from jax.experimental import pallas as pl
from jax.experimental.pallas import tpu as pltpu


# 3x3 tap offsets (oy, ox) in the order ky*3+kx, matching the weight packing.
_TAPS = tuple((dy - 1, dx - 1) for dy in range(3) for dx in range(3))


def _tap_masks_array(H, W):
    """(8, H*W) f32 validity masks for the 8 non-center taps, implementing the
    zero padding of a 3x3 / pad=1 conv.  Built once in the wrapper (hoisted
    out of the kernel) and kept resident across grid steps."""
    HW = H * W
    flat = jnp.arange(HW, dtype=jnp.int32)[None, :]
    row = flat // W
    col = flat % W
    rows = []
    for oy, ox in _TAPS:
        if oy == 0 and ox == 0:
            continue
        ok = ((row + oy >= 0) & (row + oy < H)
              & (col + ox >= 0) & (col + ox < W))
        rows.append(ok.astype(jnp.float32))
    return jnp.concatenate(rows, axis=0)                      # (8, HW)


def _conv3x3_bn(x2d, w_ref, b_ref, masks, H, W):
    """One conv3x3(pad=1, stride=1) + folded-BN stage on a (C, H*W) lane-dense
    image, expressed as 9 accumulating per-tap matmuls (no im2col buffer).

    x2d   : (Cin, HW) f32
    w_ref : (9, Cout, Cin) folded weights (BN scale already applied)
    b_ref : (Cout, 1) folded BN bias
    masks : (8, HW) boundary masks for the non-center taps
    """
    HW = H * W
    acc = None
    mask_idx = 0
    for t, (oy, ox) in enumerate(_TAPS):
        s = oy * W + ox                       # output pixel i needs x[i + s]
        if s % HW == 0:
            xt = x2d
        else:
            xt = pltpu.roll(x2d, (-s) % HW, 1)       # static lane roll (XLU)
        if not (oy == 0 and ox == 0):
            xt = xt * masks[mask_idx:mask_idx + 1, :]
            mask_idx += 1
        w_t = w_ref[t]                                        # (Cout, Cin)
        p = jnp.dot(w_t, xt, preferred_element_type=jnp.float32)
        acc = p if acc is None else acc + p
    return acc + b_ref[...]                                   # (Cout, HW)


def _basic_block_kernel(x_ref, masks_ref, w1_ref, b1_ref, w2_ref, b2_ref,
                        o_ref, *, H, W, no_relu):
    """Fused BasicBlock for `images_per_step` batch images.

    x_ref     : (Nb, Cin, H*W) lane-dense input (also the identity residual)
    masks_ref : (8, H*W)       per-tap boundary masks (resident constant)
    w1_ref    : (9, Cout, Cin) conv1 per-tap weights with BN1 scale folded in
    b1_ref    : (Cout, 1)      folded BN1 bias
    w2_ref    : (9, Cout, Cout)
    b2_ref    : (Cout, 1)
    o_ref     : (Nb, Cout, H*W)
    """
    masks = masks_ref[...]                                    # (8, HW)
    Nb = x_ref.shape[0]
    for n in range(Nb):                                       # static unroll
        x = x_ref[n]                                          # (Cin, HW)

        # conv1 + BN1 + ReLU
        y1 = _conv3x3_bn(x, w1_ref, b1_ref, masks, H, W)
        y1 = jnp.maximum(y1, 0.0)

        # conv2 + BN2 + identity residual (+ ReLU)
        y2 = _conv3x3_bn(y1, w2_ref, b2_ref, masks, H, W)
        y2 = y2 + x
        if not no_relu:
            y2 = jnp.maximum(y2, 0.0)
        o_ref[n] = y2.astype(o_ref.dtype)


def basic_block_forward(x_nchw, params, no_relu=False, images_per_step=None):
    """BasicBlock forward (stride=1, downsample=None).  x_nchw: (N, C, H, W).

    images_per_step: how many images one grid step processes.  Default = N
    (single grid step: best on 1-TC parts v5e/v6e).  Set N // 2 on v7x to
    spread the grid across both TensorCores.
    """
    N, C, H, W = x_nchw.shape
    HW = H * W
    w1, b1 = params["w1m"], params["b1"]
    w2, b2 = params["w2m"], params["b2"]
    Cout = w1.shape[1]
    assert Cout == C, "identity residual requires inplanes == planes"
    # TODO(synk): stride!=1 / downsample branch not instantiated in this
    # synthetic config (downsample=None in the reference module call).

    if images_per_step is None:
        images_per_step = N
    assert N % images_per_step == 0
    steps = N // images_per_step

    # NCHW -> (N, C, H*W) is a free row-major reshape (no transpose, no pad).
    # NOTE: assumes H*W is a multiple of 128 (true here: 16*16=256).
    x_flat = x_nchw.reshape(N, C, HW)
    masks = _tap_masks_array(H, W)                            # (8, HW)

    kernel = functools.partial(_basic_block_kernel, H=H, W=W, no_relu=no_relu)

    flops = 2 * N * 2 * Cout * 9 * C * HW                    # two conv stages
    bytes_accessed = (x_flat.size + N * Cout * HW) * 4 \
        + (w1.size + w2.size + b1.size + b2.size + masks.size) * 4

    out = pl.pallas_call(
        kernel,
        out_shape=jax.ShapeDtypeStruct((N, Cout, HW), x_nchw.dtype),
        grid_spec=pltpu.PrefetchScalarGridSpec(
            num_scalar_prefetch=0,
            grid=(steps,),
            in_specs=[
                pl.BlockSpec((images_per_step, C, HW), lambda g: (g, 0, 0)),
                pl.BlockSpec(masks.shape, lambda g: (0, 0)),       # resident
                pl.BlockSpec(w1.shape, lambda g: (0, 0, 0)),
                pl.BlockSpec(b1.shape, lambda g: (0, 0)),
                pl.BlockSpec(w2.shape, lambda g: (0, 0, 0)),
                pl.BlockSpec(b2.shape, lambda g: (0, 0)),
            ],
            out_specs=pl.BlockSpec((images_per_step, Cout, HW),
                                   lambda g: (g, 0, 0)),
        ),
        compiler_params=pltpu.CompilerParams(
            dimension_semantics=("parallel",),
            vmem_limit_bytes=32 * 1024 * 1024),
        cost_estimate=pl.CostEstimate(flops=flops, transcendentals=0,
                                      bytes_accessed=bytes_accessed),
    )(x_flat, masks, w1, b1, w2, b2)
    return out.reshape(N, Cout, H, W)


# --------------------------- parameter packing ------------------------------

def _fold_conv_bn(w_hwio, gamma, beta, mean, var, eps=1e-5):
    """HWIO (3,3,Cin,Cout) conv weight + eval-mode BN ->
       (9, Cout, Cin) per-tap scale-folded weights and (Cout, 1) bias."""
    scale = gamma / jnp.sqrt(var + eps)
    bias = beta - mean * scale
    Cin, Cout = w_hwio.shape[2], w_hwio.shape[3]
    w = jnp.transpose(w_hwio.reshape(9, Cin, Cout), (0, 2, 1))  # (9,Cout,Cin)
    w = w * scale[None, :, None]
    return w, bias.reshape(Cout, 1), scale, bias


def _init_params(key, inplanes, planes):
    ks = jax.random.split(key, 10)
    w1 = 0.1 * jax.random.normal(ks[0], (3, 3, inplanes, planes), jnp.float32)
    w2 = 0.1 * jax.random.normal(ks[1], (3, 3, planes, planes), jnp.float32)
    g1 = 1.0 + 0.1 * jax.random.normal(ks[2], (planes,), jnp.float32)
    b1 = 0.1 * jax.random.normal(ks[3], (planes,), jnp.float32)
    m1 = 0.1 * jax.random.normal(ks[4], (planes,), jnp.float32)
    v1 = jnp.abs(jax.random.normal(ks[5], (planes,), jnp.float32)) + 0.5
    g2 = 1.0 + 0.1 * jax.random.normal(ks[6], (planes,), jnp.float32)
    b2 = 0.1 * jax.random.normal(ks[7], (planes,), jnp.float32)
    m2 = 0.1 * jax.random.normal(ks[8], (planes,), jnp.float32)
    v2 = jnp.abs(jax.random.normal(ks[9], (planes,), jnp.float32)) + 0.5

    w1m, bias1, s1, bi1 = _fold_conv_bn(w1, g1, b1, m1, v1)
    w2m, bias2, s2, bi2 = _fold_conv_bn(w2, g2, b2, m2, v2)
    return {
        # kernel-side (folded) parameters
        "w1m": w1m, "b1": bias1, "w2m": w2m, "b2": bias2,
        # raw parameters for the pure-JAX reference
        "w1_hwio": w1, "w2_hwio": w2,
        "scale1": s1, "bias1v": bi1, "scale2": s2, "bias2v": bi2,
    }


# ------------------------------ reference -----------------------------------

def _reference(x_nchw, params, no_relu=False):
    x = jnp.transpose(x_nchw, (0, 2, 3, 1))
    dn = ("NHWC", "HWIO", "NHWC")
    y = lax.conv_general_dilated(x, params["w1_hwio"], (1, 1), "SAME",
                                 dimension_numbers=dn)
    y = jnp.maximum(y * params["scale1"] + params["bias1v"], 0.0)
    y = lax.conv_general_dilated(y, params["w2_hwio"], (1, 1), "SAME",
                                 dimension_numbers=dn)
    y = y * params["scale2"] + params["bias2v"] + x
    if not no_relu:
        y = jnp.maximum(y, 0.0)
    return jnp.transpose(y, (0, 3, 1, 2))


if __name__ == "__main__":
    key = jax.random.PRNGKey(0)
    kx, kp = jax.random.split(key)

    N, C, H, W = 2, 8, 16, 16          # inplanes == planes (downsample=None)
    x = jax.random.normal(kx, (N, C, H, W), jnp.float32)
    params = _init_params(kp, C, C)

    out = jax.block_until_ready(basic_block_forward(x, params, no_relu=False))
    ref = jax.block_until_ready(_reference(x, params, no_relu=False))

    assert out.shape == (N, C, H, W)
    max_err = float(jnp.max(jnp.abs(out - ref)))
    assert jnp.allclose(out, ref, atol=1e-4, rtol=1e-4), max_err

    print("KERNEL_OK")
</pallas_src>

<mosaic_0001>
module attributes {stable_mosaic.version = 11 : i64} {
  func.func @_basic_block_kernel(%arg0: i32, %arg1: memref<2x8x256xf32, #tpu.memory_space<vmem>>, %arg2: memref<8x256xf32, #tpu.memory_space<vmem>>, %arg3: memref<9x8x8xf32, #tpu.memory_space<vmem>>, %arg4: memref<8x1xf32, #tpu.memory_space<vmem>>, %arg5: memref<9x8x8xf32, #tpu.memory_space<vmem>>, %arg6: memref<8x1xf32, #tpu.memory_space<vmem>>, %arg7: memref<2x8x256xf32, #tpu.memory_space<vmem>>) attributes {dimension_semantics = [#tpu.dimension_semantics<parallel>], iteration_bounds = array<i64: 1>, scalar_prefetch = 0 : i64, scratch_operands = 0 : i64, tpu.core_type = #tpu.core_type<tc>, window_params = [{transform_indices = @transform_0, window_bounds = array<i64: 2, 8, 256>}, {pipeline_mode = #tpu.pipeline_mode<synchronous>, transform_indices = @transform_1, window_bounds = array<i64: 8, 256>}, {pipeline_mode = #tpu.pipeline_mode<synchronous>, transform_indices = @transform_2, window_bounds = array<i64: 9, 8, 8>}, {pipeline_mode = #tpu.pipeline_mode<synchronous>, transform_indices = @transform_3, window_bounds = array<i64: 8, 1>}, {pipeline_mode = #tpu.pipeline_mode<synchronous>, transform_indices = @transform_4, window_bounds = array<i64: 9, 8, 8>}, {pipeline_mode = #tpu.pipeline_mode<synchronous>, transform_indices = @transform_5, window_bounds = array<i64: 8, 1>}, {transform_indices = @transform_6, window_bounds = array<i64: 2, 8, 256>}]} {
    %c0 = arith.constant 0 : index
    %c0_0 = arith.constant 0 : index
    %0 = vector.load %arg2[%c0, %c0_0] : memref<8x256xf32, #tpu.memory_space<vmem>>, vector<8x256xf32>
    %c0_1 = arith.constant 0 : index
    %c0_2 = arith.constant 0 : index
    %c0_3 = arith.constant 0 : index
    %1 = vector.load %arg1[%c0_1, %c0_2, %c0_3] : memref<2x8x256xf32, #tpu.memory_space<vmem>>, vector<1x8x256xf32>
    %2 = vector.shape_cast %1 : vector<1x8x256xf32> to vector<8x256xf32>
    %c17_i32 = arith.constant 17 : i32
    %3 = tpu.dynamic_rotate %2 by %c17_i32 dim 1 : vector<8x256xf32>, i32 -> vector<8x256xf32>
    %4 = vector.extract_strided_slice %0 {offsets = [0, 0], sizes = [1, 256], strides = [1, 1]} : vector<8x256xf32> to vector<1x256xf32>
    %5 = vector.broadcast %4 : vector<1x256xf32> to vector<8x256xf32>
    %6 = arith.mulf %3, %5 : vector<8x256xf32>
    %c0_4 = arith.constant 0 : index
    %c0_5 = arith.constant 0 : index
    %c0_6 = arith.constant 0 : index
    %7 = vector.load %arg3[%c0_4, %c0_5, %c0_6] : memref<9x8x8xf32, #tpu.memory_space<vmem>>, vector<1x8x8xf32>
    %8 = vector.shape_cast %7 : vector<1x8x8xf32> to vector<8x8xf32>
    %cst = arith.constant dense<0.000000e+00> : vector<8x256xf32>
    %9 = tpu.matmul %8, %6, %cst {dimension_numbers = #tpu.dot_dimension_numbers<[1], [0], [0], [1], [0, 0, 1, 1], [], []>} : vector<8x8xf32>, vector<8x256xf32>, vector<8x256xf32> -> vector<8x256xf32>
    %c16_i32 = arith.constant 16 : i32
    %10 = tpu.dynamic_rotate %2 by %c16_i32 dim 1 : vector<8x256xf32>, i32 -> vector<8x256xf32>
    %11 = vector.extract_strided_slice %0 {offsets = [1, 0], sizes = [1, 256], strides = [1, 1]} : vector<8x256xf32> to vector<1x256xf32>
    %12 = vector.broadcast %11 : vector<1x256xf32> to vector<8x256xf32>
    %13 = arith.mulf %10, %12 : vector<8x256xf32>
    %c1 = arith.constant 1 : index
    %c0_7 = arith.constant 0 : index
    %c0_8 = arith.constant 0 : index
    %14 = vector.load %arg3[%c1, %c0_7, %c0_8] : memref<9x8x8xf32, #tpu.memory_space<vmem>>, vector<1x8x8xf32>
    %15 = vector.shape_cast %14 : vector<1x8x8xf32> to vector<8x8xf32>
    %cst_9 = arith.constant dense<0.000000e+00> : vector<8x256xf32>
    %16 = tpu.matmul %15, %13, %cst_9 {dimension_numbers = #tpu.dot_dimension_numbers<[1], [0], [0], [1], [0, 0, 1, 1], [], []>} : vector<8x8xf32>, vector<8x256xf32>, vector<8x256xf32> -> vector<8x256xf32>
    %17 = arith.addf %9, %16 : vector<8x256xf32>
    %c15_i32 = arith.constant 15 : i32
    %18 = tpu.dynamic_rotate %2 by %c15_i32 dim 1 : vector<8x256xf32>, i32 -> vector<8x256xf32>
    %19 = vector.extract_strided_slice %0 {offsets = [2, 0], sizes = [1, 256], strides = [1, 1]} : vector<8x256xf32> to vector<1x256xf32>
    %20 = vector.broadcast %19 : vector<1x256xf32> to vector<8x256xf32>
    %21 = arith.mulf %18, %20 : vector<8x256xf32>
    %c2 = arith.constant 2 : index
    %c0_10 = arith.constant 0 : index
    %c0_11 = arith.constant 0 : index
    %22 = vector.load %arg3[%c2, %c0_10, %c0_11] : memref<9x8x8xf32, #tpu.memory_space<vmem>>, vector<1x8x8xf32>
    %23 = vector.shape_cast %22 : vector<1x8x8xf32> to vector<8x8xf32>
    %cst_12 = arith.constant dense<0.000000e+00> : vector<8x256xf32>
    %24 = tpu.matmul %23, %21, %cst_12 {dimension_numbers = #tpu.dot_dimension_numbers<[1], [0], [0], [1], [0, 0, 1, 1], [], []>} : vector<8x8xf32>, vector<8x256xf32>, vector<8x256xf32> -> vector<8x256xf32>
    %25 = arith.addf %17, %24 : vector<8x256xf32>
    %c1_i32 = arith.constant 1 : i32
    %26 = tpu.dynamic_rotate %2 by %c1_i32 dim 1 : vector<8x256xf32>, i32 -> vector<8x256xf32>
    %27 = vector.extract_strided_slice %0 {offsets = [3, 0], sizes = [1, 256], strides = [1, 1]} : vector<8x256xf32> to vector<1x256xf32>
    %28 = vector.broadcast %27 : vector<1x256xf32> to vector<8x256xf32>
    %29 = arith.mulf %26, %28 : vector<8x256xf32>
    %c3 = arith.constant 3 : index
    %c0_13 = arith.constant 0 : index
    %c0_14 = arith.constant 0 : index
    %30 = vector.load %arg3[%c3, %c0_13, %c0_14] : memref<9x8x8xf32, #tpu.memory_space<vmem>>, vector<1x8x8xf32>
    %31 = vector.shape_cast %30 : vector<1x8x8xf32> to vector<8x8xf32>
    %cst_15 = arith.constant dense<0.000000e+00> : vector<8x256xf32>
    %32 = tpu.matmul %31, %29, %cst_15 {dimension_numbers = #tpu.dot_dimension_numbers<[1], [0], [0], [1], [0, 0, 1, 1], [], []>} : vector<8x8xf32>, vector<8x256xf32>, vector<8x256xf32> -> vector<8x256xf32>
    %33 = arith.addf %25, %32 : vector<8x256xf32>
    %c4 = arith.constant 4 : index
    %c0_16 = arith.constant 0 : index
    %c0_17 = arith.constant 0 : index
    %34 = vector.load %arg3[%c4, %c0_16, %c0_17] : memref<9x8x8xf32, #tpu.memory_space<vmem>>, vector<1x8x8xf32>
    %35 = vector.shape_cast %34 : vector<1x8x8xf32> to vector<8x8xf32>
    %cst_18 = arith.constant dense<0.000000e+00> : vector<8x256xf32>
    %36 = tpu.matmul %35, %2, %cst_18 {dimension_numbers = #tpu.dot_dimension_numbers<[1], [0], [0], [1], [0, 0, 1, 1], [], []>} : vector<8x8xf32>, vector<8x256xf32>, vector<8x256xf32> -> vector<8x256xf32>
    %37 = arith.addf %33, %36 : vector<8x256xf32>
    %c255_i32 = arith.constant 255 : i32
    %38 = tpu.dynamic_rotate %2 by %c255_i32 dim 1 : vector<8x256xf32>, i32 -> vector<8x256xf32>
    %39 = vector.extract_strided_slice %0 {offsets = [4, 0], sizes = [1, 256], strides = [1, 1]} : vector<8x256xf32> to vector<1x256xf32>
    %40 = vector.broadcast %39 : vector<1x256xf32> to vector<8x256xf32>
    %41 = arith.mulf %38, %40 : vector<8x256xf32>
    %c5 = arith.constant 5 : index
    %c0_19 = arith.constant 0 : index
    %c0_20 = arith.constant 0 : index
    %42 = vector.load %arg3[%c5, %c0_19, %c0_20] : memref<9x8x8xf32, #tpu.memory_space<vmem>>, vector<1x8x8xf32>
    %43 = vector.shape_cast %42 : vector<1x8x8xf32> to vector<8x8xf32>
    %cst_21 = arith.constant dense<0.000000e+00> : vector<8x256xf32>
    %44 = tpu.matmul %43, %41, %cst_21 {dimension_numbers = #tpu.dot_dimension_numbers<[1], [0], [0], [1], [0, 0, 1, 1], [], []>} : vector<8x8xf32>, vector<8x256xf32>, vector<8x256xf32> -> vector<8x256xf32>
    %45 = arith.addf %37, %44 : vector<8x256xf32>
    %c241_i32 = arith.constant 241 : i32
    %46 = tpu.dynamic_rotate %2 by %c241_i32 dim 1 : vector<8x256xf32>, i32 -> vector<8x256xf32>
    %47 = vector.extract_strided_slice %0 {offsets = [5, 0], sizes = [1, 256], strides = [1, 1]} : vector<8x256xf32> to vector<1x256xf32>
    %48 = vector.broadcast %47 : vector<1x256xf32> to vector<8x256xf32>
    %49 = arith.mulf %46, %48 : vector<8x256xf32>
    %c6 = arith.constant 6 : index
    %c0_22 = arith.constant 0 : index
    %c0_23 = arith.constant 0 : index
    %50 = vector.load %arg3[%c6, %c0_22, %c0_23] : memref<9x8x8xf32, #tpu.memory_space<vmem>>, vector<1x8x8xf32>
    %51 = vector.shape_cast %50 : vector<1x8x8xf32> to vector<8x8xf32>
    %cst_24 = arith.constant dense<0.000000e+00> : vector<8x256xf32>
    %52 = tpu.matmul %51, %49, %cst_24 {dimension_numbers = #tpu.dot_dimension_numbers<[1], [0], [0], [1], [0, 0, 1, 1], [], []>} : vector<8x8xf32>, vector<8x256xf32>, vector<8x256xf32> -> vector<8x256xf32>
    %53 = arith.addf %45, %52 : vector<8x256xf32>
    %c240_i32 = arith.constant 240 : i32
    %54 = tpu.dynamic_rotate %2 by %c240_i32 dim 1 : vector<8x256xf32>, i32 -> vector<8x256xf32>
    %55 = vector.extract_strided_slice %0 {offsets = [6, 0], sizes = [1, 256], strides = [1, 1]} : vector<8x256xf32> to vector<1x256xf32>
    %56 = vector.broadcast %55 : vector<1x256xf32> to vector<8x256xf32>
    %57 = arith.mulf %54, %56 : vector<8x256xf32>
    %c7 = arith.constant 7 : index
    %c0_25 = arith.constant 0 : index
    %c0_26 = arith.constant 0 : index
    %58 = vector.load %arg3[%c7, %c0_25, %c0_26] : memref<9x8x8xf32, #tpu.memory_space<vmem>>, vector<1x8x8xf32>
    %59 = vector.shape_cast %58 : vector<1x8x8xf32> to vector<8x8xf32>
    %cst_27 = arith.constant dense<0.000000e+00> : vector<8x256xf32>
    %60 = tpu.matmul %59, %57, %cst_27 {dimension_numbers = #tpu.dot_dimension_numbers<[1], [0], [0], [1], [0, 0, 1, 1], [], []>} : vector<8x8xf32>, vector<8x256xf32>, vector<8x256xf32> -> vector<8x256xf32>
    %61 = arith.addf %53, %60 : vector<8x256xf32>
    %c239_i32 = arith.constant 239 : i32
    %62 = tpu.dynamic_rotate %2 by %c239_i32 dim 1 : vector<8x256xf32>, i32 -> vector<8x256xf32>
    %63 = vector.extract_strided_slice %0 {offsets = [7, 0], sizes = [1, 256], strides = [1, 1]} : vector<8x256xf32> to vector<1x256xf32>
    %64 = vector.broadcast %63 : vector<1x256xf32> to vector<8x256xf32>
    %65 = arith.mulf %62, %64 : vector<8x256xf32>
    %c8 = arith.constant 8 : index
    %c0_28 = arith.constant 0 : index
    %c0_29 = arith.constant 0 : index
    %66 = vector.load %arg3[%c8, %c0_28, %c0_29] : memref<9x8x8xf32, #tpu.memory_space<vmem>>, vector<1x8x8xf32>
    %67 = vector.shape_cast %66 : vector<1x8x8xf32> to vector<8x8xf32>
    %cst_30 = arith.constant dense<0.000000e+00> : vector<8x256xf32>
    %68 = tpu.matmul %67, %65, %cst_30 {dimension_numbers = #tpu.dot_dimension_numbers<[1], [0], [0], [1], [0, 0, 1, 1], [], []>} : vector<8x8xf32>, vector<8x256xf32>, vector<8x256xf32> -> vector<8x256xf32>
    %69 = arith.addf %61, %68 : vector<8x256xf32>
    %c0_31 = arith.constant 0 : index
    %c0_32 = arith.constant 0 : index
    %70 = vector.load %arg4[%c0_31, %c0_32] : memref<8x1xf32, #tpu.memory_space<vmem>>, vector<8x1xf32>
    %71 = vector.broadcast %70 : vector<8x1xf32> to vector<8x256xf32>
    %72 = arith.addf %69, %71 : vector<8x256xf32>
    %cst_33 = arith.constant 0.000000e+00 : f32
    %73 = vector.broadcast %cst_33 : f32 to vector<8x256xf32>
    %74 = arith.maximumf %72, %73 : vector<8x256xf32>
    %c17_i32_34 = arith.constant 17 : i32
    %75 = tpu.dynamic_rotate %74 by %c17_i32_34 dim 1 : vector<8x256xf32>, i32 -> vector<8x256xf32>
    %76 = vector.extract_strided_slice %0 {offsets = [0, 0], sizes = [1, 256], strides = [1, 1]} : vector<8x256xf32> to vector<1x256xf32>
    %77 = vector.broadcast %76 : vector<1x256xf32> to vector<8x256xf32>
    %78 = arith.mulf %75, %77 : vector<8x256xf32>
    %c0_35 = arith.constant 0 : index
    %c0_36 = arith.constant 0 : index
    %c0_37 = arith.constant 0 : index
    %79 = vector.load %arg5[%c0_35, %c0_36, %c0_37] : memref<9x8x8xf32, #tpu.memory_space<vmem>>, vector<1x8x8xf32>
    %80 = vector.shape_cast %79 : vector<1x8x8xf32> to vector<8x8xf32>
    %cst_38 = arith.constant dense<0.000000e+00> : vector<8x256xf32>
    %81 = tpu.matmul %80, %78, %cst_38 {dimension_numbers = #tpu.dot_dimension_numbers<[1], [0], [0], [1], [0, 0, 1, 1], [], []>} : vector<8x8xf32>, vector<8x256xf32>, vector<8x256xf32> -> vector<8x256xf32>
    %c16_i32_39 = arith.constant 16 : i32
    %82 = tpu.dynamic_rotate %74 by %c16_i32_39 dim 1 : vector<8x256xf32>, i32 -> vector<8x256xf32>
    %83 = vector.extract_strided_slice %0 {offsets = [1, 0], sizes = [1, 256], strides = [1, 1]} : vector<8x256xf32> to vector<1x256xf32>
    %84 = vector.broadcast %83 : vector<1x256xf32> to vector<8x256xf32>
    %85 = arith.mulf %82, %84 : vector<8x256xf32>
    %c1_40 = arith.constant 1 : index
    %c0_41 = arith.constant 0 : index
    %c0_42 = arith.constant 0 : index
    %86 = vector.load %arg5[%c1_40, %c0_41, %c0_42] : memref<9x8x8xf32, #tpu.memory_space<vmem>>, vector<1x8x8xf32>
    %87 = vector.shape_cast %86 : vector<1x8x8xf32> to vector<8x8xf32>
    %cst_43 = arith.constant dense<0.000000e+00> : vector<8x256xf32>
    %88 = tpu.matmul %87, %85, %cst_43 {dimension_numbers = #tpu.dot_dimension_numbers<[1], [0], [0], [1], [0, 0, 1, 1], [], []>} : vector<8x8xf32>, vector<8x256xf32>, vector<8x256xf32> -> vector<8x256xf32>
    %89 = arith.addf %81, %88 : vector<8x256xf32>
    %c15_i32_44 = arith.constant 15 : i32
    %90 = tpu.dynamic_rotate %74 by %c15_i32_44 dim 1 : vector<8x256xf32>, i32 -> vector<8x256xf32>
    %91 = vector.extract_strided_slice %0 {offsets = [2, 0], sizes = [1, 256], strides = [1, 1]} : vector<8x256xf32> to vector<1x256xf32>
    %92 = vector.broadcast %91 : vector<1x256xf32> to vector<8x256xf32>
    %93 = arith.mulf %90, %92 : vector<8x256xf32>
    %c2_45 = arith.constant 2 : index
    %c0_46 = arith.constant 0 : index
    %c0_47 = arith.constant 0 : index
    %94 = vector.load %arg5[%c2_45, %c0_46, %c0_47] : memref<9x8x8xf32, #tpu.memory_space<vmem>>, vector<1x8x8xf32>
    %95 = vector.shape_cast %94 : vector<1x8x8xf32> to vector<8x8xf32>
    %cst_48 = arith.constant dense<0.000000e+00> : vector<8x256xf32>
    %96 = tpu.matmul %95, %93, %cst_48 {dimension_numbers = #tpu.dot_dimension_numbers<[1], [0], [0], [1], [0, 0, 1, 1], [], []>} : vector<8x8xf32>, vector<8x256xf32>, vector<8x256xf32> -> vector<8x256xf32>
    %97 = arith.addf %89, %96 : vector<8x256xf32>
    %c1_i32_49 = arith.constant 1 : i32
    %98 = tpu.dynamic_rotate %74 by %c1_i32_49 dim 1 : vector<8x256xf32>, i32 -> vector<8x256xf32>
    %99 = vector.extract_strided_slice %0 {offsets = [3, 0], sizes = [1, 256], strides = [1, 1]} : vector<8x256xf32> to vector<1x256xf32>
    %100 = vector.broadcast %99 : vector<1x256xf32> to vector<8x256xf32>
    %101 = arith.mulf %98, %100 : vector<8x256xf32>
    %c3_50 = arith.constant 3 : index
    %c0_51 = arith.constant 0 : index
    %c0_52 = arith.constant 0 : index
    %102 = vector.load %arg5[%c3_50, %c0_51, %c0_52] : memref<9x8x8xf32, #tpu.memory_space<vmem>>, vector<1x8x8xf32>
    %103 = vector.shape_cast %102 : vector<1x8x8xf32> to vector<8x8xf32>
    %cst_53 = arith.constant dense<0.000000e+00> : vector<8x256xf32>
    %104 = tpu.matmul %103, %101, %cst_53 {dimension_numbers = #tpu.dot_dimension_numbers<[1], [0], [0], [1], [0, 0, 1, 1], [], []>} : vector<8x8xf32>, vector<8x256xf32>, vector<8x256xf32> -> vector<8x256xf32>
    %105 = arith.addf %97, %104 : vector<8x256xf32>
    %c4_54 = arith.constant 4 : index
    %c0_55 = arith.constant 0 : index
    %c0_56 = arith.constant 0 : index
    %106 = vector.load %arg5[%c4_54, %c0_55, %c0_56] : memref<9x8x8xf32, #tpu.memory_space<vmem>>, vector<1x8x8xf32>
    %107 = vector.shape_cast %106 : vector<1x8x8xf32> to vector<8x8xf32>
    %cst_57 = arith.constant dense<0.000000e+00> : vector<8x256xf32>
    %108 = tpu.matmul %107, %74, %cst_57 {dimension_numbers = #tpu.dot_dimension_numbers<[1], [0], [0], [1], [0, 0, 1, 1], [], []>} : vector<8x8xf32>, vector<8x256xf32>, vector<8x256xf32> -> vector<8x256xf32>
    %109 = arith.addf %105, %108 : vector<8x256xf32>
    %c255_i32_58 = arith.constant 255 : i32
    %110 = tpu.dynamic_rotate %74 by %c255_i32_58 dim 1 : vector<8x256xf32>, i32 -> vector<8x256xf32>
    %111 = vector.extract_strided_slice %0 {offsets = [4, 0], sizes = [1, 256], strides = [1, 1]} : vector<8x256xf32> to vector<1x256xf32>
    %112 = vector.broadcast %111 : vector<1x256xf32> to vector<8x256xf32>
    %113 = arith.mulf %110, %112 : vector<8x256xf32>
    %c5_59 = arith.constant 5 : index
    %c0_60 = arith.constant 0 : index
    %c0_61 = arith.constant 0 : index
    %114 = vector.load %arg5[%c5_59, %c0_60, %c0_61] : memref<9x8x8xf32, #tpu.memory_space<vmem>>, vector<1x8x8xf32>
    %115 = vector.shape_cast %114 : vector<1x8x8xf32> to vector<8x8xf32>
    %cst_62 = arith.constant dense<0.000000e+00> : vector<8x256xf32>
    %116 = tpu.matmul %115, %113, %cst_62 {dimension_numbers = #tpu.dot_dimension_numbers<[1], [0], [0], [1], [0, 0, 1, 1], [], []>} : vector<8x8xf32>, vector<8x256xf32>, vector<8x256xf32> -> vector<8x256xf32>
    %117 = arith.addf %109, %116 : vector<8x256xf32>
    %c241_i32_63 = arith.constant 241 : i32
    %118 = tpu.dynamic_rotate %74 by %c241_i32_63 dim 1 : vector<8x256xf32>, i32 -> vector<8x256xf32>
    %119 = vector.extract_strided_slice %0 {offsets = [5, 0], sizes = [1, 256], strides = [1, 1]} : vector<8x256xf32> to vector<1x256xf32>
    %120 = vector.broadcast %119 : vector<1x256xf32> to vector<8x256xf32>
    %121 = arith.mulf %118, %120 : vector<8x256xf32>
    %c6_64 = arith.constant 6 : index
    %c0_65 = arith.constant 0 : index
    %c0_66 = arith.constant 0 : index
    %122 = vector.load %arg5[%c6_64, %c0_65, %c0_66] : memref<9x8x8xf32, #tpu.memory_space<vmem>>, vector<1x8x8xf32>
    %123 = vector.shape_cast %122 : vector<1x8x8xf32> to vector<8x8xf32>
    %cst_67 = arith.constant dense<0.000000e+00> : vector<8x256xf32>
    %124 = tpu.matmul %123, %121, %cst_67 {dimension_numbers = #tpu.dot_dimension_numbers<[1], [0], [0], [1], [0, 0, 1, 1], [], []>} : vector<8x8xf32>, vector<8x256xf32>, vector<8x256xf32> -> vector<8x256xf32>
    %125 = arith.addf %117, %124 : vector<8x256xf32>
    %c240_i32_68 = arith.constant 240 : i32
    %126 = tpu.dynamic_rotate %74 by %c240_i32_68 dim 1 : vector<8x256xf32>, i32 -> vector<8x256xf32>
    %127 = vector.extract_strided_slice %0 {offsets = [6, 0], sizes = [1, 256], strides = [1, 1]} : vector<8x256xf32> to vector<1x256xf32>
    %128 = vector.broadcast %127 : vector<1x256xf32> to vector<8x256xf32>
    %129 = arith.mulf %126, %128 : vector<8x256xf32>
    %c7_69 = arith.constant 7 : index
    %c0_70 = arith.constant 0 : index
    %c0_71 = arith.constant 0 : index
    %130 = vector.load %arg5[%c7_69, %c0_70, %c0_71] : memref<9x8x8xf32, #tpu.memory_space<vmem>>, vector<1x8x8xf32>
    %131 = vector.shape_cast %130 : vector<1x8x8xf32> to vector<8x8xf32>
    %cst_72 = arith.constant dense<0.000000e+00> : vector<8x256xf32>
    %132 = tpu.matmul %131, %129, %cst_72 {dimension_numbers = #tpu.dot_dimension_numbers<[1], [0], [0], [1], [0, 0, 1, 1], [], []>} : vector<8x8xf32>, vector<8x256xf32>, vector<8x256xf32> -> vector<8x256xf32>
    %133 = arith.addf %125, %132 : vector<8x256xf32>
    %c239_i32_73 = arith.constant 239 : i32
    %134 = tpu.dynamic_rotate %74 by %c239_i32_73 dim 1 : vector<8x256xf32>, i32 -> vector<8x256xf32>
    %135 = vector.extract_strided_slice %0 {offsets = [7, 0], sizes = [1, 256], strides = [1, 1]} : vector<8x256xf32> to vector<1x256xf32>
    %136 = vector.broadcast %135 : vector<1x256xf32> to vector<8x256xf32>
    %137 = arith.mulf %134, %136 : vector<8x256xf32>
    %c8_74 = arith.constant 8 : index
    %c0_75 = arith.constant 0 : index
    %c0_76 = arith.constant 0 : index
    %138 = vector.load %arg5[%c8_74, %c0_75, %c0_76] : memref<9x8x8xf32, #tpu.memory_space<vmem>>, vector<1x8x8xf32>
    %139 = vector.shape_cast %138 : vector<1x8x8xf32> to vector<8x8xf32>
    %cst_77 = arith.constant dense<0.000000e+00> : vector<8x256xf32>
    %140 = tpu.matmul %139, %137, %cst_77 {dimension_numbers = #tpu.dot_dimension_numbers<[1], [0], [0], [1], [0, 0, 1, 1], [], []>} : vector<8x8xf32>, vector<8x256xf32>, vector<8x256xf32> -> vector<8x256xf32>
    %141 = arith.addf %133, %140 : vector<8x256xf32>
    %c0_78 = arith.constant 0 : index
    %c0_79 = arith.constant 0 : index
    %142 = vector.load %arg6[%c0_78, %c0_79] : memref<8x1xf32, #tpu.memory_space<vmem>>, vector<8x1xf32>
    %143 = vector.broadcast %142 : vector<8x1xf32> to vector<8x256xf32>
    %144 = arith.addf %141, %143 : vector<8x256xf32>
    %145 = arith.addf %144, %2 : vector<8x256xf32>
    %cst_80 = arith.constant 0.000000e+00 : f32
    %146 = vector.broadcast %cst_80 : f32 to vector<8x256xf32>
    %147 = arith.maximumf %145, %146 : vector<8x256xf32>
    %c0_81 = arith.constant 0 : index
    %c0_82 = arith.constant 0 : index
    %c0_83 = arith.constant 0 : index
    %148 = vector.load %arg7[%c0_81, %c0_82, %c0_83] : memref<2x8x256xf32, #tpu.memory_space<vmem>>, vector<1x8x256xf32>
    %149 = vector.shape_cast %148 : vector<1x8x256xf32> to vector<8x256xf32>
    %150 = vector.shape_cast %147 : vector<8x256xf32> to vector<1x8x256xf32>
    tpu.vector_store %arg7[%c0_81, %c0_82, %c0_83], %150 {strides = array<i32>} : memref<2x8x256xf32, #tpu.memory_space<vmem>>, vector<1x8x256xf32>,
    %c1_84 = arith.constant 1 : index
    %c0_85 = arith.constant 0 : index
    %c0_86 = arith.constant 0 : index
    %151 = vector.load %arg1[%c1_84, %c0_85, %c0_86] : memref<2x8x256xf32, #tpu.memory_space<vmem>>, vector<1x8x256xf32>
    %152 = vector.shape_cast %151 : vector<1x8x256xf32> to vector<8x256xf32>
    %c17_i32_87 = arith.constant 17 : i32
    %153 = tpu.dynamic_rotate %152 by %c17_i32_87 dim 1 : vector<8x256xf32>, i32 -> vector<8x256xf32>
    %154 = vector.extract_strided_slice %0 {offsets = [0, 0], sizes = [1, 256], strides = [1, 1]} : vector<8x256xf32> to vector<1x256xf32>
    %155 = vector.broadcast %154 : vector<1x256xf32> to vector<8x256xf32>
    %156 = arith.mulf %153, %155 : vector<8x256xf32>
    %c0_88 = arith.constant 0 : index
    %c0_89 = arith.constant 0 : index
    %c0_90 = arith.constant 0 : index
    %157 = vector.load %arg3[%c0_88, %c0_89, %c0_90] : memref<9x8x8xf32, #tpu.memory_space<vmem>>, vector<1x8x8xf32>
    %158 = vector.shape_cast %157 : vector<1x8x8xf32> to vector<8x8xf32>
    %cst_91 = arith.constant dense<0.000000e+00> : vector<8x256xf32>
    %159 = tpu.matmul %158, %156, %cst_91 {dimension_numbers = #tpu.dot_dimension_numbers<[1], [0], [0], [1], [0, 0, 1, 1], [], []>} : vector<8x8xf32>, vector<8x256xf32>, vector<8x256xf32> -> vector<8x256xf32>
    %c16_i32_92 = arith.constant 16 : i32
    %160 = tpu.dynamic_rotate %152 by %c16_i32_92 dim 1 : vector<8x256xf32>, i32 -> vector<8x256xf32>
    %161 = vector.extract_strided_slice %0 {offsets = [1, 0], sizes = [1, 256], strides = [1, 1]} : vector<8x256xf32> to vector<1x256xf32>
    %162 = vector.broadcast %161 : vector<1x256xf32> to vector<8x256xf32>
    %163 = arith.mulf %160, %162 : vector<8x256xf32>
    %c1_93 = arith.constant 1 : index
    %c0_94 = arith.constant 0 : index
    %c0_95 = arith.constant 0 : index
    %164 = vector.load %arg3[%c1_93, %c0_94, %c0_95] : memref<9x8x8xf32, #tpu.memory_space<vmem>>, vector<1x8x8xf32>
    %165 = vector.shape_cast %164 : vector<1x8x8xf32> to vector<8x8xf32>
    %cst_96 = arith.constant dense<0.000000e+00> : vector<8x256xf32>
    %166 = tpu.matmul %165, %163, %cst_96 {dimension_numbers = #tpu.dot_dimension_numbers<[1], [0], [0], [1], [0, 0, 1, 1], [], []>} : vector<8x8xf32>, vector<8x256xf32>, vector<8x256xf32> -> vector<8x256xf32>
    %167 = arith.addf %159, %166 : vector<8x256xf32>
    %c15_i32_97 = arith.constant 15 : i32
    %168 = tpu.dynamic_rotate %152 by %c15_i32_97 dim 1 : vector<8x256xf32>, i32 -> vector<8x256xf32>
    %169 = vector.extract_strided_slice %0 {offsets = [2, 0], sizes = [1, 256], strides = [1, 1]} : vector<8x256xf32> to vector<1x256xf32>
    %170 = vector.broadcast %169 : vector<1x256xf32> to vector<8x256xf32>
    %171 = arith.mulf %168, %170 : vector<8x256xf32>
    %c2_98 = arith.constant 2 : index
    %c0_99 = arith.constant 0 : index
    %c0_100 = arith.constant 0 : index
    %172 = vector.load %arg3[%c2_98, %c0_99, %c0_100] : memref<9x8x8xf32, #tpu.memory_space<vmem>>, vector<1x8x8xf32>
    %173 = vector.shape_cast %172 : vector<1x8x8xf32> to vector<8x8xf32>
    %cst_101 = arith.constant dense<0.000000e+00> : vector<8x256xf32>
    %174 = tpu.matmul %173, %171, %cst_101 {dimension_numbers = #tpu.dot_dimension_numbers<[1], [0], [0], [1], [0, 0, 1, 1], [], []>} : vector<8x8xf32>, vector<8x256xf32>, vector<8x256xf32> -> vector<8x256xf32>
    %175 = arith.addf %167, %174 : vector<8x256xf32>
    %c1_i32_102 = arith.constant 1 : i32
    %176 = tpu.dynamic_rotate %152 by %c1_i32_102 dim 1 : vector<8x256xf32>, i32 -> vector<8x256xf32>
    %177 = vector.extract_strided_slice %0 {offsets = [3, 0], sizes = [1, 256], strides = [1, 1]} : vector<8x256xf32> to vector<1x256xf32>
    %178 = vector.broadcast %177 : vector<1x256xf32> to vector<8x256xf32>
    %179 = arith.mulf %176, %178 : vector<8x256xf32>
    %c3_103 = arith.constant 3 : index
    %c0_104 = arith.constant 0 : index
    %c0_105 = arith.constant 0 : index
    %180 = vector.load %arg3[%c3_103, %c0_104, %c0_105] : memref<9x8x8xf32, #tpu.memory_space<vmem>>, vector<1x8x8xf32>
    %181 = vector.shape_cast %180 : vector<1x8x8xf32> to vector<8x8xf32>
    %cst_106 = arith.constant dense<0.000000e+00> : vector<8x256xf32>
    %182 = tpu.matmul %181, %179, %cst_106 {dimension_numbers = #tpu.dot_dimension_numbers<[1], [0], [0], [1], [0, 0, 1, 1], [], []>} : vector<8x8xf32>, vector<8x256xf32>, vector<8x256xf32> -> vector<8x256xf32>
    %183 = arith.addf %175, %182 : vector<8x256xf32>
    %c4_107 = arith.constant 4 : index
    %c0_108 = arith.constant 0 : index
    %c0_109 = arith.constant 0 : index
    %184 = vector.load %arg3[%c4_107, %c0_108, %c0_109] : memref<9x8x8xf32, #tpu.memory_space<vmem>>, vector<1x8x8xf32>
    %185 = vector.shape_cast %184 : vector<1x8x8xf32> to vector<8x8xf32>
    %cst_110 = arith.constant dense<0.000000e+00> : vector<8x256xf32>
    %186 = tpu.matmul %185, %152, %cst_110 {dimension_numbers = #tpu.dot_dimension_numbers<[1], [0], [0], [1], [0, 0, 1, 1], [], []>} : vector<8x8xf32>, vector<8x256xf32>, vector<8x256xf32> -> vector<8x256xf32>
    %187 = arith.addf %183, %186 : vector<8x256xf32>
    %c255_i32_111 = arith.constant 255 : i32
    %188 = tpu.dynamic_rotate %152 by %c255_i32_111 dim 1 : vector<8x256xf32>, i32 -> vector<8x256xf32>
    %189 = vector.extract_strided_slice %0 {offsets = [4, 0], sizes = [1, 256], strides = [1, 1]} : vector<8x256xf32> to vector<1x256xf32>
    %190 = vector.broadcast %189 : vector<1x256xf32> to vector<8x256xf32>
    %191 = arith.mulf %188, %190 : vector<8x256xf32>
    %c5_112 = arith.constant 5 : index
    %c0_113 = arith.constant 0 : index
    %c0_114 = arith.constant 0 : index
    %192 = vector.load %arg3[%c5_112, %c0_113, %c0_114] : memref<9x8x8xf32, #tpu.memory_space<vmem>>, vector<1x8x8xf32>
    %193 = vector.shape_cast %192 : vector<1x8x8xf32> to vector<8x8xf32>
    %cst_115 = arith.constant dense<0.000000e+00> : vector<8x256xf32>
    %194 = tpu.matmul %193, %191, %cst_115 {dimension_numbers = #tpu.dot_dimension_numbers<[1], [0], [0], [1], [0, 0, 1, 1], [], []>} : vector<8x8xf32>, vector<8x256xf32>, vector<8x256xf32> -> vector<8x256xf32>
    %195 = arith.addf %187, %194 : vector<8x256xf32>
    %c241_i32_116 = arith.constant 241 : i32
    %196 = tpu.dynamic_rotate %152 by %c241_i32_116 dim 1 : vector<8x256xf32>, i32 -> vector<8x256xf32>
    %197 = vector.extract_strided_slice %0 {offsets = [5, 0], sizes = [1, 256], strides = [1, 1]} : vector<8x256xf32> to vector<1x256xf32>
    %198 = vector.broadcast %197 : vector<1x256xf32> to vector<8x256xf32>
    %199 = arith.mulf %196, %198 : vector<8x256xf32>
    %c6_117 = arith.constant 6 : index
    %c0_118 = arith.constant 0 : index
    %c0_119 = arith.constant 0 : index
    %200 = vector.load %arg3[%c6_117, %c0_118, %c0_119] : memref<9x8x8xf32, #tpu.memory_space<vmem>>, vector<1x8x8xf32>
    %201 = vector.shape_cast %200 : vector<1x8x8xf32> to vector<8x8xf32>
    %cst_120 = arith.constant dense<0.000000e+00> : vector<8x256xf32>
    %202 = tpu.matmul %201, %199, %cst_120 {dimension_numbers = #tpu.dot_dimension_numbers<[1], [0], [0], [1], [0, 0, 1, 1], [], []>} : vector<8x8xf32>, vector<8x256xf32>, vector<8x256xf32> -> vector<8x256xf32>
    %203 = arith.addf %195, %202 : vector<8x256xf32>
    %c240_i32_121 = arith.constant 240 : i32
    %204 = tpu.dynamic_rotate %152 by %c240_i32_121 dim 1 : vector<8x256xf32>, i32 -> vector<8x256xf32>
    %205 = vector.extract_strided_slice %0 {offsets = [6, 0], sizes = [1, 256], strides = [1, 1]} : vector<8x256xf32> to vector<1x256xf32>
    %206 = vector.broadcast %205 : vector<1x256xf32> to vector<8x256xf32>
    %207 = arith.mulf %204, %206 : vector<8x256xf32>
    %c7_122 = arith.constant 7 : index
    %c0_123 = arith.constant 0 : index
    %c0_124 = arith.constant 0 : index
    %208 = vector.load %arg3[%c7_122, %c0_123, %c0_124] : memref<9x8x8xf32, #tpu.memory_space<vmem>>, vector<1x8x8xf32>
    %209 = vector.shape_cast %208 : vector<1x8x8xf32> to vector<8x8xf32>
    %cst_125 = arith.constant dense<0.000000e+00> : vector<8x256xf32>
    %210 = tpu.matmul %209, %207, %cst_125 {dimension_numbers = #tpu.dot_dimension_numbers<[1], [0], [0], [1], [0, 0, 1, 1], [], []>} : vector<8x8xf32>, vector<8x256xf32>, vector<8x256xf32> -> vector<8x256xf32>
    %211 = arith.addf %203, %210 : vector<8x256xf32>
    %c239_i32_126 = arith.constant 239 : i32
    %212 = tpu.dynamic_rotate %152 by %c239_i32_126 dim 1 : vector<8x256xf32>, i32 -> vector<8x256xf32>
    %213 = vector.extract_strided_slice %0 {offsets = [7, 0], sizes = [1, 256], strides = [1, 1]} : vector<8x256xf32> to vector<1x256xf32>
    %214 = vector.broadcast %213 : vector<1x256xf32> to vector<8x256xf32>
    %215 = arith.mulf %212, %214 : vector<8x256xf32>
    %c8_127 = arith.constant 8 : index
    %c0_128 = arith.constant 0 : index
    %c0_129 = arith.constant 0 : index
    %216 = vector.load %arg3[%c8_127, %c0_128, %c0_129] : memref<9x8x8xf32, #tpu.memory_space<vmem>>, vector<1x8x8xf32>
    %217 = vector.shape_cast %216 : vector<1x8x8xf32> to vector<8x8xf32>
    %cst_130 = arith.constant dense<0.000000e+00> : vector<8x256xf32>
    %218 = tpu.matmul %217, %215, %cst_130 {dimension_numbers = #tpu.dot_dimension_numbers<[1], [0], [0], [1], [0, 0, 1, 1], [], []>} : vector<8x8xf32>, vector<8x256xf32>, vector<8x256xf32> -> vector<8x256xf32>
    %219 = arith.addf %211, %218 : vector<8x256xf32>
    %c0_131 = arith.constant 0 : index
    %c0_132 = arith.constant 0 : index
    %220 = vector.load %arg4[%c0_131, %c0_132] : memref<8x1xf32, #tpu.memory_space<vmem>>, vector<8x1xf32>
    %221 = vector.broadcast %220 : vector<8x1xf32> to vector<8x256xf32>
    %222 = arith.addf %219, %221 : vector<8x256xf32>
    %cst_133 = arith.constant 0.000000e+00 : f32
    %223 = vector.broadcast %cst_133 : f32 to vector<8x256xf32>
    %224 = arith.maximumf %222, %223 : vector<8x256xf32>
    %c17_i32_134 = arith.constant 17 : i32
    %225 = tpu.dynamic_rotate %224 by %c17_i32_134 dim 1 : vector<8x256xf32>, i32 -> vector<8x256xf32>
    %226 = vector.extract_strided_slice %0 {offsets = [0, 0], sizes = [1, 256], strides = [1, 1]} : vector<8x256xf32> to vector<1x256xf32>
    %227 = vector.broadcast %226 : vector<1x256xf32> to vector<8x256xf32>
    %228 = arith.mulf %225, %227 : vector<8x256xf32>
    %c0_135 = arith.constant 0 : index
    %c0_136 = arith.constant 0 : index
    %c0_137 = arith.constant 0 : index
    %229 = vector.load %arg5[%c0_135, %c0_136, %c0_137] : memref<9x8x8xf32, #tpu.memory_space<vmem>>, vector<1x8x8xf32>
    %230 = vector.shape_cast %229 : vector<1x8x8xf32> to vector<8x8xf32>
    %cst_138 = arith.constant dense<0.000000e+00> : vector<8x256xf32>
    %231 = tpu.matmul %230, %228, %cst_138 {dimension_numbers = #tpu.dot_dimension_numbers<[1], [0], [0], [1], [0, 0, 1, 1], [], []>} : vector<8x8xf32>, vector<8x256xf32>, vector<8x256xf32> -> vector<8x256xf32>
    %c16_i32_139 = arith.constant 16 : i32
    %232 = tpu.dynamic_rotate %224 by %c16_i32_139 dim 1 : vector<8x256xf32>, i32 -> vector<8x256xf32>
    %233 = vector.extract_strided_slice %0 {offsets = [1, 0], sizes = [1, 256], strides = [1, 1]} : vector<8x256xf32> to vector<1x256xf32>
    %234 = vector.broadcast %233 : vector<1x256xf32> to vector<8x256xf32>
    %235 = arith.mulf %232, %234 : vector<8x256xf32>
    %c1_140 = arith.constant 1 : index
    %c0_141 = arith.constant 0 : index
    %c0_142 = arith.constant 0 : index
    %236 = vector.load %arg5[%c1_140, %c0_141, %c0_142] : memref<9x8x8xf32, #tpu.memory_space<vmem>>, vector<1x8x8xf32>
    %237 = vector.shape_cast %236 : vector<1x8x8xf32> to vector<8x8xf32>
    %cst_143 = arith.constant dense<0.000000e+00> : vector<8x256xf32>
    %238 = tpu.matmul %237, %235, %cst_143 {dimension_numbers = #tpu.dot_dimension_numbers<[1], [0], [0], [1], [0, 0, 1, 1], [], []>} : vector<8x8xf32>, vector<8x256xf32>, vector<8x256xf32> -> vector<8x256xf32>
    %239 = arith.addf %231, %238 : vector<8x256xf32>
    %c15_i32_144 = arith.constant 15 : i32
    %240 = tpu.dynamic_rotate %224 by %c15_i32_144 dim 1 : vector<8x256xf32>, i32 -> vector<8x256xf32>
    %241 = vector.extract_strided_slice %0 {offsets = [2, 0], sizes = [1, 256], strides = [1, 1]} : vector<8x256xf32> to vector<1x256xf32>
    %242 = vector.broadcast %241 : vector<1x256xf32> to vector<8x256xf32>
    %243 = arith.mulf %240, %242 : vector<8x256xf32>
    %c2_145 = arith.constant 2 : index
    %c0_146 = arith.constant 0 : index
    %c0_147 = arith.constant 0 : index
    %244 = vector.load %arg5[%c2_145, %c0_146, %c0_147] : memref<9x8x8xf32, #tpu.memory_space<vmem>>, vector<1x8x8xf32>
    %245 = vector.shape_cast %244 : vector<1x8x8xf32> to vector<8x8xf32>
    %cst_148 = arith.constant dense<0.000000e+00> : vector<8x256xf32>
    %246 = tpu.matmul %245, %243, %cst_148 {dimension_numbers = #tpu.dot_dimension_numbers<[1], [0], [0], [1], [0, 0, 1, 1], [], []>} : vector<8x8xf32>, vector<8x256xf32>, vector<8x256xf32> -> vector<8x256xf32>
    %247 = arith.addf %239, %246 : vector<8x256xf32>
    %c1_i32_149 = arith.constant 1 : i32
    %248 = tpu.dynamic_rotate %224 by %c1_i32_149 dim 1 : vector<8x256xf32>, i32 -> vector<8x256xf32>
    %249 = vector.extract_strided_slice %0 {offsets = [3, 0], sizes = [1, 256], strides = [1, 1]} : vector<8x256xf32> to vector<1x256xf32>
    %250 = vector.broadcast %249 : vector<1x256xf32> to vector<8x256xf32>
    %251 = arith.mulf %248, %250 : vector<8x256xf32>
    %c3_150 = arith.constant 3 : index
    %c0_151 = arith.constant 0 : index
    %c0_152 = arith.constant 0 : index
    %252 = vector.load %arg5[%c3_150, %c0_151, %c0_152] : memref<9x8x8xf32, #tpu.memory_space<vmem>>, vector<1x8x8xf32>
    %253 = vector.shape_cast %252 : vector<1x8x8xf32> to vector<8x8xf32>
    %cst_153 = arith.constant dense<0.000000e+00> : vector<8x256xf32>
    %254 = tpu.matmul %253, %251, %cst_153 {dimension_numbers = #tpu.dot_dimension_numbers<[1], [0], [0], [1], [0, 0, 1, 1], [], []>} : vector<8x8xf32>, vector<8x256xf32>, vector<8x256xf32> -> vector<8x256xf32>
    %255 = arith.addf %247, %254 : vector<8x256xf32>
    %c4_154 = arith.constant 4 : index
    %c0_155 = arith.constant 0 : index
    %c0_156 = arith.constant 0 : index
    %256 = vector.load %arg5[%c4_154, %c0_155, %c0_156] : memref<9x8x8xf32, #tpu.memory_space<vmem>>, vector<1x8x8xf32>
    %257 = vector.shape_cast %256 : vector<1x8x8xf32> to vector<8x8xf32>
    %cst_157 = arith.constant dense<0.000000e+00> : vector<8x256xf32>
    %258 = tpu.matmul %257, %224, %cst_157 {dimension_numbers = #tpu.dot_dimension_numbers<[1], [0], [0], [1], [0, 0, 1, 1], [], []>} : vector<8x8xf32>, vector<8x256xf32>, vector<8x256xf32> -> vector<8x256xf32>
    %259 = arith.addf %255, %258 : vector<8x256xf32>
    %c255_i32_158 = arith.constant 255 : i32
    %260 = tpu.dynamic_rotate %224 by %c255_i32_158 dim 1 : vector<8x256xf32>, i32 -> vector<8x256xf32>
    %261 = vector.extract_strided_slice %0 {offsets = [4, 0], sizes = [1, 256], strides = [1, 1]} : vector<8x256xf32> to vector<1x256xf32>
    %262 = vector.broadcast %261 : vector<1x256xf32> to vector<8x256xf32>
    %263 = arith.mulf %260, %262 : vector<8x256xf32>
    %c5_159 = arith.constant 5 : index
    %c0_160 = arith.constant 0 : index
    %c0_161 = arith.constant 0 : index
    %264 = vector.load %arg5[%c5_159, %c0_160, %c0_161] : memref<9x8x8xf32, #tpu.memory_space<vmem>>, vector<1x8x8xf32>
    %265 = vector.shape_cast %264 : vector<1x8x8xf32> to vector<8x8xf32>
    %cst_162 = arith.constant dense<0.000000e+00> : vector<8x256xf32>
    %266 = tpu.matmul %265, %263, %cst_162 {dimension_numbers = #tpu.dot_dimension_numbers<[1], [0], [0], [1], [0, 0, 1, 1], [], []>} : vector<8x8xf32>, vector<8x256xf32>, vector<8x256xf32> -> vector<8x256xf32>
    %267 = arith.addf %259, %266 : vector<8x256xf32>
    %c241_i32_163 = arith.constant 241 : i32
    %268 = tpu.dynamic_rotate %224 by %c241_i32_163 dim 1 : vector<8x256xf32>, i32 -> vector<8x256xf32>
    %269 = vector.extract_strided_slice %0 {offsets = [5, 0], sizes = [1, 256], strides = [1, 1]} : vector<8x256xf32> to vector<1x256xf32>
    %270 = vector.broadcast %269 : vector<1x256xf32> to vector<8x256xf32>
    %271 = arith.mulf %268, %270 : vector<8x256xf32>
    %c6_164 = arith.constant 6 : index
    %c0_165 = arith.constant 0 : index
    %c0_166 = arith.constant 0 : index
    %272 = vector.load %arg5[%c6_164, %c0_165, %c0_166] : memref<9x8x8xf32, #tpu.memory_space<vmem>>, vector<1x8x8xf32>
    %273 = vector.shape_cast %272 : vector<1x8x8xf32> to vector<8x8xf32>
    %cst_167 = arith.constant dense<0.000000e+00> : vector<8x256xf32>
    %274 = tpu.matmul %273, %271, %cst_167 {dimension_numbers = #tpu.dot_dimension_numbers<[1], [0], [0], [1], [0, 0, 1, 1], [], []>} : vector<8x8xf32>, vector<8x256xf32>, vector<8x256xf32> -> vector<8x256xf32>
    %275 = arith.addf %267, %274 : vector<8x256xf32>
    %c240_i32_168 = arith.constant 240 : i32
    %276 = tpu.dynamic_rotate %224 by %c240_i32_168 dim 1 : vector<8x256xf32>, i32 -> vector<8x256xf32>
    %277 = vector.extract_strided_slice %0 {offsets = [6, 0], sizes = [1, 256], strides = [1, 1]} : vector<8x256xf32> to vector<1x256xf32>
    %278 = vector.broadcast %277 : vector<1x256xf32> to vector<8x256xf32>
    %279 = arith.mulf %276, %278 : vector<8x256xf32>
    %c7_169 = arith.constant 7 : index
    %c0_170 = arith.constant 0 : index
    %c0_171 = arith.constant 0 : index
    %280 = vector.load %arg5[%c7_169, %c0_170, %c0_171] : memref<9x8x8xf32, #tpu.memory_space<vmem>>, vector<1x8x8xf32>
    %281 = vector.shape_cast %280 : vector<1x8x8xf32> to vector<8x8xf32>
    %cst_172 = arith.constant dense<0.000000e+00> : vector<8x256xf32>
    %282 = tpu.matmul %281, %279, %cst_172 {dimension_numbers = #tpu.dot_dimension_numbers<[1], [0], [0], [1], [0, 0, 1, 1], [], []>} : vector<8x8xf32>, vector<8x256xf32>, vector<8x256xf32> -> vector<8x256xf32>
    %283 = arith.addf %275, %282 : vector<8x256xf32>
    %c239_i32_173 = arith.constant 239 : i32
    %284 = tpu.dynamic_rotate %224 by %c239_i32_173 dim 1 : vector<8x256xf32>, i32 -> vector<8x256xf32>
    %285 = vector.extract_strided_slice %0 {offsets = [7, 0], sizes = [1, 256], strides = [1, 1]} : vector<8x256xf32> to vector<1x256xf32>
    %286 = vector.broadcast %285 : vector<1x256xf32> to vector<8x256xf32>
    %287 = arith.mulf %284, %286 : vector<8x256xf32>
    %c8_174 = arith.constant 8 : index
    %c0_175 = arith.constant 0 : index
    %c0_176 = arith.constant 0 : index
    %288 = vector.load %arg5[%c8_174, %c0_175, %c0_176] : memref<9x8x8xf32, #tpu.memory_space<vmem>>, vector<1x8x8xf32>
    %289 = vector.shape_cast %288 : vector<1x8x8xf32> to vector<8x8xf32>
    %cst_177 = arith.constant dense<0.000000e+00> : vector<8x256xf32>
    %290 = tpu.matmul %289, %287, %cst_177 {dimension_numbers = #tpu.dot_dimension_numbers<[1], [0], [0], [1], [0, 0, 1, 1], [], []>} : vector<8x8xf32>, vector<8x256xf32>, vector<8x256xf32> -> vector<8x256xf32>
    %291 = arith.addf %283, %290 : vector<8x256xf32>
    %c0_178 = arith.constant 0 : index
    %c0_179 = arith.constant 0 : index
    %292 = vector.load %arg6[%c0_178, %c0_179] : memref<8x1xf32, #tpu.memory_space<vmem>>, vector<8x1xf32>
    %293 = vector.broadcast %292 : vector<8x1xf32> to vector<8x256xf32>
    %294 = arith.addf %291, %293 : vector<8x256xf32>
    %295 = arith.addf %294, %152 : vector<8x256xf32>
    %cst_180 = arith.constant 0.000000e+00 : f32
    %296 = vector.broadcast %cst_180 : f32 to vector<8x256xf32>
    %297 = arith.maximumf %295, %296 : vector<8x256xf32>
    %c1_181 = arith.constant 1 : index
    %c0_182 = arith.constant 0 : index
    %c0_183 = arith.constant 0 : index
    %298 = vector.load %arg7[%c1_181, %c0_182, %c0_183] : memref<2x8x256xf32, #tpu.memory_space<vmem>>, vector<1x8x256xf32>
    %299 = vector.shape_cast %298 : vector<1x8x256xf32> to vector<8x256xf32>
    %300 = vector.shape_cast %297 : vector<8x256xf32> to vector<1x8x256xf32>
    tpu.vector_store %arg7[%c1_181, %c0_182, %c0_183], %300 {strides = array<i32>} : memref<2x8x256xf32, #tpu.memory_space<vmem>>, vector<1x8x256xf32>,
    return
  }
  func.func @transform_0(%arg0: i32) -> (i32, i32, i32) {
    %c0_i32 = arith.constant 0 : i32
    %c0_i32_0 = arith.constant 0 : i32
    %c0_i32_1 = arith.constant 0 : i32
    return %arg0, %c0_i32, %c0_i32_0 : i32, i32, i32
  }
  func.func @transform_1(%arg0: i32) -> (i32, i32) {
    %c0_i32 = arith.constant 0 : i32
    %c0_i32_0 = arith.constant 0 : i32
    %c0_i32_1 = arith.constant 0 : i32
    return %c0_i32, %c0_i32_0 : i32, i32
  }
  func.func @transform_2(%arg0: i32) -> (i32, i32, i32) {
    %c0_i32 = arith.constant 0 : i32
    %c0_i32_0 = arith.constant 0 : i32
    %c0_i32_1 = arith.constant 0 : i32
    %c0_i32_2 = arith.constant 0 : i32
    return %c0_i32, %c0_i32_0, %c0_i32_1 : i32, i32, i32
  }
  func.func @transform_3(%arg0: i32) -> (i32, i32) {
    %c0_i32 = arith.constant 0 : i32
    %c0_i32_0 = arith.constant 0 : i32
    %c0_i32_1 = arith.constant 0 : i32
    return %c0_i32, %c0_i32_0 : i32, i32
  }
  func.func @transform_4(%arg0: i32) -> (i32, i32, i32) {
    %c0_i32 = arith.constant 0 : i32
    %c0_i32_0 = arith.constant 0 : i32
    %c0_i32_1 = arith.constant 0 : i32
    %c0_i32_2 = arith.constant 0 : i32
    return %c0_i32, %c0_i32_0, %c0_i32_1 : i32, i32, i32
  }
  func.func @transform_5(%arg0: i32) -> (i32, i32) {
    %c0_i32 = arith.constant 0 : i32
    %c0_i32_0 = arith.constant 0 : i32
    %c0_i32_1 = arith.constant 0 : i32
    return %c0_i32, %c0_i32_0 : i32, i32
  }
  func.func @transform_6(%arg0: i32) -> (i32, i32, i32) {
    %c0_i32 = arith.constant 0 : i32
    %c0_i32_0 = arith.constant 0 : i32
    %c0_i32_1 = arith.constant 0 : i32
    return %arg0, %c0_i32, %c0_i32_0 : i32, i32, i32
  }
}

</mosaic_0001>

<llo_original>
// kernel: tpu_custom_call.1
$region0: #{tpu_custom_call.1}
  #allocation0 [shape = 'u32[]', space=smem, size = 0x4, offset = 0x4, fixed_abs, tag = 'smem constant byte address 0x4 - core index']
  #allocation1 [shape = 'u32[72,128]{1,0:T(1,128)}', space=vmem, size = 0x9000, scoped, tag = 'internal scratch']
  %s0 = inlined_call_operand.vmem [shape: f32[2,8,256], index: 0, kind: input, shape index: {}]
  %s1 = inlined_call_operand.vmem [shape: f32[8,256], index: 1, kind: input, shape index: {}]
  %s2 = inlined_call_operand.vmem [shape: f32[9,8,8], index: 2, kind: input, shape index: {}]
  %s3 = inlined_call_operand.vmem [shape: f32[8,1], index: 3, kind: input, shape index: {}]
  %s4 = inlined_call_operand.vmem [shape: f32[9,8,8], index: 4, kind: input, shape index: {}]
  %s5 = inlined_call_operand.vmem [shape: f32[8,1], index: 5, kind: input, shape index: {}]
  %s6 = inlined_call_operand.hbm [shape: f32[2,8,256], index: 6, kind: output, shape index: {}]
  %s7 = sld [smem:[#allocation0]]
  $region34: #{tpu_custom_call.1} parent=0
    _
  %s9 = ssub.s32 1, %s7
  %s10 = scalar_select 0, %s9, %s7
  $region1: #{tpu_custom_call.1} parent=0
    #allocation2 [shape = 'u8[16384]{0}', space=vmem, size = 0x4000, scoped, tag = 'output window, operand 0, single buffered']
    #allocation3 [shape = 's32[1]{0}', space=sflag, size = 0x4, scoped, tag = 'scoped memory for tpu_custom_call.1']
    %11 = vsyncpa [#allocation3], 0
    // Predicated region
    $region2: #{tpu_custom_call.1} parent=1 // pred_check
      _
    $region3: #{tpu_custom_call.1} parent=1 // pred_check_branch
      %13 = sbr.rel (0) target = $region5
    $region4: #{tpu_custom_call.1} parent=1 // pred_region
      _
    $region5: #{tpu_custom_call.1} parent=1 // pred_fallthru
      _
    // Predicated region
    $region6: #{tpu_custom_call.1} parent=1 // pred_check
      _
    $region7: #{tpu_custom_call.1} parent=1 // pred_check_branch
      %15 = sbr.rel (0) target = $region9
    $region8: #{tpu_custom_call.1} parent=1 // pred_region
      _
    $region9: #{tpu_custom_call.1} parent=1 // pred_fallthru
      _
    // Predicated region
    $region10: #{tpu_custom_call.1} parent=1 // pred_check
      _
    $region11: #{tpu_custom_call.1} parent=1 // pred_check_branch
      %17 = sbr.rel (0) target = $region13
    $region12: #{tpu_custom_call.1} parent=1 // pred_region
      _
    $region13: #{tpu_custom_call.1} parent=1 // pred_fallthru
      _
    // Predicated region
    $region14: #{tpu_custom_call.1} parent=1 // pred_check
      _
    $region15: #{tpu_custom_call.1} parent=1 // pred_check_branch
      %19 = sbr.rel (0) target = $region17
    $region16: #{tpu_custom_call.1} parent=1 // pred_region
      _
    $region17: #{tpu_custom_call.1} parent=1 // pred_fallthru
      _
    // Predicated region
    $region18: #{tpu_custom_call.1} parent=1 // pred_check
      _
    $region19: #{tpu_custom_call.1} parent=1 // pred_check_branch
      %21 = sbr.rel (0) target = $region21
    $region20: #{tpu_custom_call.1} parent=1 // pred_region
      _
    $region21: #{tpu_custom_call.1} parent=1 // pred_fallthru
      _
    // Predicated region
    $region22: #{tpu_custom_call.1} parent=1 // pred_check
      _
    $region23: #{tpu_custom_call.1} parent=1 // pred_check_branch
      %23 = sbr.rel (0) target = $region25
    $region24: #{tpu_custom_call.1} parent=1 // pred_region
      _
    $region25: #{tpu_custom_call.1} parent=1 // pred_fallthru
      _
    %v24 = vld [vmem:[%s1] sm:$0xff]
    %v25 = vld [vmem:[%s1 + $0x8] sm:$0xff]
    %v26 = vld [vmem:[%s0] sm:$0xff]
    %v27 = vld [vmem:[%s0 + $0x8] sm:$0xff]
    %28 = vrot.lane.b32.xlu0 %v26, 17
    %v29 = vpop.permute.xlu0 %28
    %30 = vrot.lane.b32.xlu0 %v27, 17
    %v31 = vpop.permute.xlu0 %30
    %v32 = vlaneseq
    %v33 = vand.u32 %v32, 127
    %vm34 = vcmp.lt.s32.totalorder %v33, 17
    %v35 = vsel %vm34, %v29, %v31
    %v36 = vsel %vm34, %v31, %v29
    %v37 = vperm.slane %v24, 0
    %v38 = vperm.slane %v25, 0
    %v39 = vmul.f32 %v36, %v37
    %v40 = vmul.f32 %v35, %v38
    %v41 = vld [vmem:[%s2] sm:$0xff]
    %42 = vrot.lane.b32.xlu0 %v26, 16
    %v43 = vpop.permute.xlu0 %42
    %44 = vrot.lane.b32.xlu0 %v27, 16
    %v45 = vpop.permute.xlu0 %44
    %vm46 = vcmp.lt.s32.totalorder %v33, 16
    %v47 = vsel %vm46, %v43, %v45
    %v48 = vsel %vm46, %v45, %v43
    %v49 = vperm.slane %v24, 1
    %v50 = vperm.slane %v25, 1
    %v51 = vmul.f32 %v48, %v49
    %v52 = vmul.f32 %v47, %v50
    %s53 = scalar_lea.vmem %s2, 8
    %v54 = vld [vmem:[%s53] sm:$0xff]
    %vm55 = vcmask 64512
    %v57 = vsel %vm55, %v54, 0
    %59 = vmatpush.msra.mxu0 0.0
    %60 = vmatpush.msra.mxu0 0.0
    %61 = vmatpush.msra.mxu0 0.0
    %62 = vmatpush.msra.mxu0 0.0
    %63 = vmatpush.msra.mxu0 0.0
    %64 = vmatpush.msra.mxu0 0.0
    %65 = vmatpush.msra.mxu0 0.0
    %66 = vmatpush.msra.mxu0 0.0
    %67 = vmatpush.msra.mxu0 0.0
    %68 = vmatpush.msra.mxu0 0.0
    %69 = vmatpush.msra.mxu0 0.0
    %70 = vmatpush.msra.mxu0 0.0
    %71 = vmatpush.msra.mxu0 0.0
    %72 = vmatpush.msra.mxu0 0.0
    %73 = vmatpush.msra.mxu0 0.0
    %74 = vmatpush.msra.mxu0 %v51
    %75 = vmatmul.f32.gmra.mxu0 %v57
    %v76 = vpop.f32.mrf.mxu0
    %v77 = vadd.f32 0.0, %v76
    %78 = vdwg.mxu0
    %79 = vmatpush.msra.mxu0 0.0
    %80 = vmatpush.msra.mxu0 0.0
    %81 = vmatpush.msra.mxu0 0.0
    %82 = vmatpush.msra.mxu0 0.0
    %83 = vmatpush.msra.mxu0 0.0
    %84 = vmatpush.msra.mxu0 0.0
    %85 = vmatpush.msra.mxu0 0.0
    %86 = vmatpush.msra.mxu0 0.0
    %87 = vmatpush.msra.mxu0 0.0
    %88 = vmatpush.msra.mxu0 0.0
    %89 = vmatpush.msra.mxu0 0.0
    %90 = vmatpush.msra.mxu0 0.0
    %91 = vmatpush.msra.mxu0 0.0
    %92 = vmatpush.msra.mxu0 0.0
    %93 = vmatpush.msra.mxu0 0.0
    %94 = vmatpush.msra.mxu0 %v52
    %95 = vmatmul.f32.gmra.mxu0 %v57
    %v96 = vpop.f32.mrf.mxu0
    %v97 = vadd.f32 0.0, %v96
    %98 = vdwg.mxu0
    %v100 = vsel %vm55, %v41, 0
    %102 = vmatpush.msra.mxu0 0.0
    %103 = vmatpush.msra.mxu0 0.0
    %104 = vmatpush.msra.mxu0 0.0
    %105 = vmatpush.msra.mxu0 0.0
    %106 = vmatpush.msra.mxu0 0.0
    %107 = vmatpush.msra.mxu0 0.0
    %108 = vmatpush.msra.mxu0 0.0
    %109 = vmatpush.msra.mxu0 0.0
    %110 = vmatpush.msra.mxu0 0.0
    %111 = vmatpush.msra.mxu0 0.0
    %112 = vmatpush.msra.mxu0 0.0
    %113 = vmatpush.msra.mxu0 0.0
    %114 = vmatpush.msra.mxu0 0.0
    %115 = vmatpush.msra.mxu0 0.0
    %116 = vmatpush.msra.mxu0 0.0
    %117 = vmatpush.msra.mxu0 %v39
    %118 = vmatmul.f32.gmra.mxu0 %v100
    %v119 = vpop.f32.mrf.mxu0
    %v120 = vadd.f32 %v77, %v119
    %121 = vdwg.mxu0
    %122 = vmatpush.msra.mxu0 0.0
    %123 = vmatpush.msra.mxu0 0.0
    %124 = vmatpush.msra.mxu0 0.0
    %125 = vmatpush.msra.mxu0 0.0
    %126 = vmatpush.msra.mxu0 0.0
    %127 = vmatpush.msra.mxu0 0.0
    %128 = vmatpush.msra.mxu0 0.0
    %129 = vmatpush.msra.mxu0 0.0
    %130 = vmatpush.msra.mxu0 0.0
    %131 = vmatpush.msra.mxu0 0.0
    %132 = vmatpush.msra.mxu0 0.0
    %133 = vmatpush.msra.mxu0 0.0
    %134 = vmatpush.msra.mxu0 0.0
    %135 = vmatpush.msra.mxu0 0.0
    %136 = vmatpush.msra.mxu0 0.0
    %137 = vmatpush.msra.mxu0 %v40
    %138 = vmatmul.f32.gmra.mxu0 %v100
    %v139 = vpop.f32.mrf.mxu0
    %v140 = vadd.f32 %v97, %v139
    %141 = vdwg.mxu0
    %142 = vrot.lane.b32.xlu0 %v26, 15
    %v143 = vpop.permute.xlu0 %142
    %144 = vrot.lane.b32.xlu0 %v27, 15
    %v145 = vpop.permute.xlu0 %144
    %vm146 = vcmp.lt.s32.totalorder %v33, 15
    %v147 = vsel %vm146, %v143, %v145
    %v148 = vsel %vm146, %v145, %v143
    %v149 = vperm.slane %v24, 2
    %v150 = vperm.slane %v25, 2
    %v151 = vmul.f32 %v148, %v149
    %v152 = vmul.f32 %v147, %v150
    %s153 = scalar_lea.vmem %s2, 16
    %v154 = vld [vmem:[%s153] sm:$0xff]
    %v156 = vsel %vm55, %v154, 0
    %158 = vmatpush.msra.mxu0 0.0
    %159 = vmatpush.msra.mxu0 0.0
    %160 = vmatpush.msra.mxu0 0.0
    %161 = vmatpush.msra.mxu0 0.0
    %162 = vmatpush.msra.mxu0 0.0
    %163 = vmatpush.msra.mxu0 0.0
    %164 = vmatpush.msra.mxu0 0.0
    %165 = vmatpush.msra.mxu0 0.0
    %166 = vmatpush.msra.mxu0 0.0
    %167 = vmatpush.msra.mxu0 0.0
    %168 = vmatpush.msra.mxu0 0.0
    %169 = vmatpush.msra.mxu0 0.0
    %170 = vmatpush.msra.mxu0 0.0
    %171 = vmatpush.msra.mxu0 0.0
    %172 = vmatpush.msra.mxu0 0.0
    %173 = vmatpush.msra.mxu0 %v151
    %174 = vmatmul.f32.gmra.mxu0 %v156
    %v175 = vpop.f32.mrf.mxu0
    %v176 = vadd.f32 0.0, %v175
    %177 = vdwg.mxu0
    %178 = vmatpush.msra.mxu0 0.0
    %179 = vmatpush.msra.mxu0 0.0
    %180 = vmatpush.msra.mxu0 0.0
    %181 = vmatpush.msra.mxu0 0.0
    %182 = vmatpush.msra.mxu0 0.0
    %183 = vmatpush.msra.mxu0 0.0
    %184 = vmatpush.msra.mxu0 0.0
    %185 = vmatpush.msra.mxu0 0.0
    %186 = vmatpush.msra.mxu0 0.0
    %187 = vmatpush.msra.mxu0 0.0
    %188 = vmatpush.msra.mxu0 0.0
    %189 = vmatpush.msra.mxu0 0.0
    %190 = vmatpush.msra.mxu0 0.0
    %191 = vmatpush.msra.mxu0 0.0
    %192 = vmatpush.msra.mxu0 0.0
    %193 = vmatpush.msra.mxu0 %v152
    %194 = vmatmul.f32.gmra.mxu0 %v156
    %v195 = vpop.f32.mrf.mxu0
    %v196 = vadd.f32 0.0, %v195
    %197 = vdwg.mxu0
    %v198 = vadd.f32 %v120, %v176
    %v199 = vadd.f32 %v140, %v196
    %200 = vrot.lane.b32.xlu0 %v26, 1
    %v201 = vpop.permute.xlu0 %200
    %202 = vrot.lane.b32.xlu0 %v27, 1
    %v203 = vpop.permute.xlu0 %202
    %vm204 = vcmp.lt.s32.totalorder %v33, 1
    %v205 = vsel %vm204, %v201, %v203
    %v206 = vsel %vm204, %v203, %v201
    %v207 = vperm.slane %v24, 3
    %v208 = vperm.slane %v25, 3
    %v209 = vmul.f32 %v206, %v207
    %v210 = vmul.f32 %v205, %v208
    %s211 = scalar_lea.vmem %s2, 24
    %v212 = vld [vmem:[%s211] sm:$0xff]
    %v214 = vsel %vm55, %v212, 0
    %216 = vmatpush.msra.mxu0 0.0
    %217 = vmatpush.msra.mxu0 0.0
    %218 = vmatpush.msra.mxu0 0.0
    %219 = vmatpush.msra.mxu0 0.0
    %220 = vmatpush.msra.mxu0 0.0
    %221 = vmatpush.msra.mxu0 0.0
    %222 = vmatpush.msra.mxu0 0.0
    %223 = vmatpush.msra.mxu0 0.0
    %224 = vmatpush.msra.mxu0 0.0
    %225 = vmatpush.msra.mxu0 0.0
    %226 = vmatpush.msra.mxu0 0.0
    %227 = vmatpush.msra.mxu0 0.0
    %228 = vmatpush.msra.mxu0 0.0
    %229 = vmatpush.msra.mxu0 0.0
    %230 = vmatpush.msra.mxu0 0.0
    %231 = vmatpush.msra.mxu0 %v209
    %232 = vmatmul.f32.gmra.mxu0 %v214
    %v233 = vpop.f32.mrf.mxu0
    %v234 = vadd.f32 0.0, %v233
    %235 = vdwg.mxu0
    %236 = vmatpush.msra.mxu0 0.0
    %237 = vmatpush.msra.mxu0 0.0
    %238 = vmatpush.msra.mxu0 0.0
    %239 = vmatpush.msra.mxu0 0.0
    %240 = vmatpush.msra.mxu0 0.0
    %241 = vmatpush.msra.mxu0 0.0
    %242 = vmatpush.msra.mxu0 0.0
    %243 = vmatpush.msra.mxu0 0.0
    %244 = vmatpush.msra.mxu0 0.0
    %245 = vmatpush.msra.mxu0 0.0
    %246 = vmatpush.msra.mxu0 0.0
    %247 = vmatpush.msra.mxu0 0.0
    %248 = vmatpush.msra.mxu0 0.0
    %249 = vmatpush.msra.mxu0 0.0
    %250 = vmatpush.msra.mxu0 0.0
    %251 = vmatpush.msra.mxu0 %v210
    %252 = vmatmul.f32.gmra.mxu0 %v214
    %v253 = vpop.f32.mrf.mxu0
    %v254 = vadd.f32 0.0, %v253
    %255 = vdwg.mxu0
    %v256 = vadd.f32 %v198, %v234
    %v257 = vadd.f32 %v199, %v254
    %s258 = scalar_lea.vmem %s2, 32
    %v259 = vld [vmem:[%s258] sm:$0xff]
    %v261 = vsel %vm55, %v259, 0
    %263 = vmatpush.msra.mxu0 0.0
    %264 = vmatpush.msra.mxu0 0.0
    %265 = vmatpush.msra.mxu0 0.0
    %266 = vmatpush.msra.mxu0 0.0
    %267 = vmatpush.msra.mxu0 0.0
    %268 = vmatpush.msra.mxu0 0.0
    %269 = vmatpush.msra.mxu0 0.0
    %270 = vmatpush.msra.mxu0 0.0
    %271 = vmatpush.msra.mxu0 0.0
    %272 = vmatpush.msra.mxu0 0.0
    %273 = vmatpush.msra.mxu0 0.0
    %274 = vmatpush.msra.mxu0 0.0
    %275 = vmatpush.msra.mxu0 0.0
    %276 = vmatpush.msra.mxu0 0.0
    %277 = vmatpush.msra.mxu0 0.0
    %278 = vmatpush.msra.mxu0 %v26
    %279 = vmatmul.f32.gmra.mxu0 %v261
    %v280 = vpop.f32.mrf.mxu0
    %v281 = vadd.f32 0.0, %v280
    %282 = vdwg.mxu0
    %283 = vmatpush.msra.mxu0 0.0
    %284 = vmatpush.msra.mxu0 0.0
    %285 = vmatpush.msra.mxu0 0.0
    %286 = vmatpush.msra.mxu0 0.0
    %287 = vmatpush.msra.mxu0 0.0
    %288 = vmatpush.msra.mxu0 0.0
    %289 = vmatpush.msra.mxu0 0.0
    %290 = vmatpush.msra.mxu0 0.0
    %291 = vmatpush.msra.mxu0 0.0
    %292 = vmatpush.msra.mxu0 0.0
    %293 = vmatpush.msra.mxu0 0.0
    %294 = vmatpush.msra.mxu0 0.0
    %295 = vmatpush.msra.mxu0 0.0
    %296 = vmatpush.msra.mxu0 0.0
    %297 = vmatpush.msra.mxu0 0.0
    %298 = vmatpush.msra.mxu0 %v27
    %299 = vmatmul.f32.gmra.mxu0 %v261
    %v300 = vpop.f32.mrf.mxu0
    %v301 = vadd.f32 0.0, %v300
    %302 = vdwg.mxu0
    %v303 = vadd.f32 %v256, %v281
    %v304 = vadd.f32 %v257, %v301
    %305 = vrot.lane.b32.xlu0 %v26, 127
    %v306 = vpop.permute.xlu0 %305
    %307 = vrot.lane.b32.xlu0 %v27, 127
    %v308 = vpop.permute.xlu0 %307
    %vm309 = vcmp.lt.s32.totalorder %v33, 127
    %v310 = vsel %vm309, %v306, %v308
    %v311 = vsel %vm309, %v308, %v306
    %v312 = vperm.slane %v24, 4
    %v313 = vperm.slane %v25, 4
    %v314 = vmul.f32 %v310, %v312
    %v315 = vmul.f32 %v311, %v313
    %s316 = scalar_lea.vmem %s2, 40
    %v317 = vld [vmem:[%s316] sm:$0xff]
    %v319 = vsel %vm55, %v317, 0
    %321 = vmatpush.msra.mxu0 0.0
    %322 = vmatpush.msra.mxu0 0.0
    %323 = vmatpush.msra.mxu0 0.0
    %324 = vmatpush.msra.mxu0 0.0
    %325 = vmatpush.msra.mxu0 0.0
    %326 = vmatpush.msra.mxu0 0.0
    %327 = vmatpush.msra.mxu0 0.0
    %328 = vmatpush.msra.mxu0 0.0
    %329 = vmatpush.msra.mxu0 0.0
    %330 = vmatpush.msra.mxu0 0.0
    %331 = vmatpush.msra.mxu0 0.0
    %332 = vmatpush.msra.mxu0 0.0
    %333 = vmatpush.msra.mxu0 0.0
    %334 = vmatpush.msra.mxu0 0.0
    %335 = vmatpush.msra.mxu0 0.0
    %336 = vmatpush.msra.mxu0 %v314
    %337 = vmatmul.f32.gmra.mxu0 %v319
    %v338 = vpop.f32.mrf.mxu0
    %v339 = vadd.f32 0.0, %v338
    %340 = vdwg.mxu0
    %341 = vmatpush.msra.mxu0 0.0
    %342 = vmatpush.msra.mxu0 0.0
    %343 = vmatpush.msra.mxu0 0.0
    %344 = vmatpush.msra.mxu0 0.0
    %345 = vmatpush.msra.mxu0 0.0
    %346 = vmatpush.msra.mxu0 0.0
    %347 = vmatpush.msra.mxu0 0.0
    %348 = vmatpush.msra.mxu0 0.0
    %349 = vmatpush.msra.mxu0 0.0
    %350 = vmatpush.msra.mxu0 0.0
    %351 = vmatpush.msra.mxu0 0.0
    %352 = vmatpush.msra.mxu0 0.0
    %353 = vmatpush.msra.mxu0 0.0
    %354 = vmatpush.msra.mxu0 0.0
    %355 = vmatpush.msra.mxu0 0.0
    %356 = vmatpush.msra.mxu0 %v315
    %357 = vmatmul.f32.gmra.mxu0 %v319
    %v358 = vpop.f32.mrf.mxu0
    %v359 = vadd.f32 0.0, %v358
    %360 = vdwg.mxu0
    %v361 = vadd.f32 %v303, %v339
    %v362 = vadd.f32 %v304, %v359
    %363 = vrot.lane.b32.xlu0 %v26, 113
    %v364 = vpop.permute.xlu0 %363
    %365 = vrot.lane.b32.xlu0 %v27, 113
    %v366 = vpop.permute.xlu0 %365
    %vm367 = vcmp.lt.s32.totalorder %v33, 113
    %v368 = vsel %vm367, %v364, %v366
    %v369 = vsel %vm367, %v366, %v364
    %v370 = vperm.slane %v24, 5
    %v371 = vperm.slane %v25, 5
    %v372 = vmul.f32 %v368, %v370
    %v373 = vmul.f32 %v369, %v371
    %s374 = scalar_lea.vmem %s2, 48
    %v375 = vld [vmem:[%s374] sm:$0xff]
    %v377 = vsel %vm55, %v375, 0
    %379 = vmatpush.msra.mxu0 0.0
    %380 = vmatpush.msra.mxu0 0.0
    %381 = vmatpush.msra.mxu0 0.0
    %382 = vmatpush.msra.mxu0 0.0
    %383 = vmatpush.msra.mxu0 0.0
    %384 = vmatpush.msra.mxu0 0.0
    %385 = vmatpush.msra.mxu0 0.0
    %386 = vmatpush.msra.mxu0 0.0
    %387 = vmatpush.msra.mxu0 0.0
    %388 = vmatpush.msra.mxu0 0.0
    %389 = vmatpush.msra.mxu0 0.0
    %390 = vmatpush.msra.mxu0 0.0
    %391 = vmatpush.msra.mxu0 0.0
    %392 = vmatpush.msra.mxu0 0.0
    %393 = vmatpush.msra.mxu0 0.0
    %394 = vmatpush.msra.mxu0 %v372
    %395 = vmatmul.f32.gmra.mxu0 %v377
    %v396 = vpop.f32.mrf.mxu0
    %v397 = vadd.f32 0.0, %v396
    %398 = vdwg.mxu0
    %399 = vmatpush.msra.mxu0 0.0
    %400 = vmatpush.msra.mxu0 0.0
    %401 = vmatpush.msra.mxu0 0.0
    %402 = vmatpush.msra.mxu0 0.0
    %403 = vmatpush.msra.mxu0 0.0
    %404 = vmatpush.msra.mxu0 0.0
    %405 = vmatpush.msra.mxu0 0.0
    %406 = vmatpush.msra.mxu0 0.0
    %407 = vmatpush.msra.mxu0 0.0
    %408 = vmatpush.msra.mxu0 0.0
    %409 = vmatpush.msra.mxu0 0.0
    %410 = vmatpush.msra.mxu0 0.0
    %411 = vmatpush.msra.mxu0 0.0
    %412 = vmatpush.msra.mxu0 0.0
    %413 = vmatpush.msra.mxu0 0.0
    %414 = vmatpush.msra.mxu0 %v373
    %415 = vmatmul.f32.gmra.mxu0 %v377
    %v416 = vpop.f32.mrf.mxu0
    %v417 = vadd.f32 0.0, %v416
    %418 = vdwg.mxu0
    %v419 = vadd.f32 %v361, %v397
    %v420 = vadd.f32 %v362, %v417
    %421 = vrot.lane.b32.xlu0 %v26, 112
    %v422 = vpop.permute.xlu0 %421
    %423 = vrot.lane.b32.xlu0 %v27, 112
    %v424 = vpop.permute.xlu0 %423
    %vm425 = vcmp.lt.s32.totalorder %v33, 112
    %v426 = vsel %vm425, %v422, %v424
    %v427 = vsel %vm425, %v424, %v422
    %v428 = vperm.slane %v24, 6
    %v429 = vperm.slane %v25, 6
    %v430 = vmul.f32 %v426, %v428
    %v431 = vmul.f32 %v427, %v429
    %s432 = scalar_lea.vmem %s2, 56
    %v433 = vld [vmem:[%s432] sm:$0xff]
    %v435 = vsel %vm55, %v433, 0
    %437 = vmatpush.msra.mxu0 0.0
    %438 = vmatpush.msra.mxu0 0.0
    %439 = vmatpush.msra.mxu0 0.0
    %440 = vmatpush.msra.mxu0 0.0
    %441 = vmatpush.msra.mxu0 0.0
    %442 = vmatpush.msra.mxu0 0.0
    %443 = vmatpush.msra.mxu0 0.0
    %444 = vmatpush.msra.mxu0 0.0
    %445 = vmatpush.msra.mxu0 0.0
    %446 = vmatpush.msra.mxu0 0.0
    %447 = vmatpush.msra.mxu0 0.0
    %448 = vmatpush.msra.mxu0 0.0
    %449 = vmatpush.msra.mxu0 0.0
    %450 = vmatpush.msra.mxu0 0.0
    %451 = vmatpush.msra.mxu0 0.0
    %452 = vmatpush.msra.mxu0 %v430
    %453 = vmatmul.f32.gmra.mxu0 %v435
    %v454 = vpop.f32.mrf.mxu0
    %v455 = vadd.f32 0.0, %v454
    %456 = vdwg.mxu0
    %457 = vmatpush.msra.mxu0 0.0
    %458 = vmatpush.msra.mxu0 0.0
    %459 = vmatpush.msra.mxu0 0.0
    %460 = vmatpush.msra.mxu0 0.0
    %461 = vmatpush.msra.mxu0 0.0
    %462 = vmatpush.msra.mxu0 0.0
    %463 = vmatpush.msra.mxu0 0.0
    %464 = vmatpush.msra.mxu0 0.0
    %465 = vmatpush.msra.mxu0 0.0
    %466 = vmatpush.msra.mxu0 0.0
    %467 = vmatpush.msra.mxu0 0.0
    %468 = vmatpush.msra.mxu0 0.0
    %469 = vmatpush.msra.mxu0 0.0
    %470 = vmatpush.msra.mxu0 0.0
    %471 = vmatpush.msra.mxu0 0.0
    %472 = vmatpush.msra.mxu0 %v431
    %473 = vmatmul.f32.gmra.mxu0 %v435
    %v474 = vpop.f32.mrf.mxu0
    %v475 = vadd.f32 0.0, %v474
    %476 = vdwg.mxu0
    %v477 = vadd.f32 %v419, %v455
    %v478 = vadd.f32 %v420, %v475
    %479 = vrot.lane.b32.xlu0 %v26, 111
    %v480 = vpop.permute.xlu0 %479
    %481 = vrot.lane.b32.xlu0 %v27, 111
    %v482 = vpop.permute.xlu0 %481
    %vm483 = vcmp.lt.s32.totalorder %v33, 111
    %v484 = vsel %vm483, %v480, %v482
    %v485 = vsel %vm483, %v482, %v480
    %v486 = vperm.slane %v24, 7
    %v487 = vperm.slane %v25, 7
    %v488 = vmul.f32 %v484, %v486
    %v489 = vmul.f32 %v485, %v487
    %s490 = scalar_lea.vmem %s2, 64
    %v491 = vld [vmem:[%s490] sm:$0xff]
    %v493 = vsel %vm55, %v491, 0
    %495 = vmatpush.msra.mxu0 0.0
    %496 = vmatpush.msra.mxu0 0.0
    %497 = vmatpush.msra.mxu0 0.0
    %498 = vmatpush.msra.mxu0 0.0
    %499 = vmatpush.msra.mxu0 0.0
    %500 = vmatpush.msra.mxu0 0.0
    %501 = vmatpush.msra.mxu0 0.0
    %502 = vmatpush.msra.mxu0 0.0
    %503 = vmatpush.msra.mxu0 0.0
    %504 = vmatpush.msra.mxu0 0.0
    %505 = vmatpush.msra.mxu0 0.0
    %506 = vmatpush.msra.mxu0 0.0
    %507 = vmatpush.msra.mxu0 0.0
    %508 = vmatpush.msra.mxu0 0.0
    %509 = vmatpush.msra.mxu0 0.0
    %510 = vmatpush.msra.mxu0 %v488
    %511 = vmatmul.f32.gmra.mxu0 %v493
    %v512 = vpop.f32.mrf.mxu0
    %v513 = vadd.f32 0.0, %v512
    %514 = vdwg.mxu0
    %515 = vmatpush.msra.mxu0 0.0
    %516 = vmatpush.msra.mxu0 0.0
    %517 = vmatpush.msra.mxu0 0.0
    %518 = vmatpush.msra.mxu0 0.0
    %519 = vmatpush.msra.mxu0 0.0
    %520 = vmatpush.msra.mxu0 0.0
    %521 = vmatpush.msra.mxu0 0.0
    %522 = vmatpush.msra.mxu0 0.0
    %523 = vmatpush.msra.mxu0 0.0
    %524 = vmatpush.msra.mxu0 0.0
    %525 = vmatpush.msra.mxu0 0.0
    %526 = vmatpush.msra.mxu0 0.0
    %527 = vmatpush.msra.mxu0 0.0
    %528 = vmatpush.msra.mxu0 0.0
    %529 = vmatpush.msra.mxu0 0.0
    %530 = vmatpush.msra.mxu0 %v489
    %531 = vmatmul.f32.gmra.mxu0 %v493
    %v532 = vpop.f32.mrf.mxu0
    %v533 = vadd.f32 0.0, %v532
    %534 = vdwg.mxu0
    %v535 = vadd.f32 %v477, %v513
    %v536 = vadd.f32 %v478, %v533
    %v537 = vld [vmem:[%s3] sm:$0xff]
    %539 = vset.pattern.permute.xlu0 0
    %540 = vperm.xlu0 %539, %v537
    %v541 = vpop.permute.xlu0 %540
    %v543 = vadd.f32 %v535, %v541
    %v544 = vadd.f32 %v536, %v541
    %v545 = vmax.f32 %v543, 0.0
    %v546 = vmax.f32 %v544, 0.0
    %547 = vrot.lane.b32.xlu0 %v545, 17
    %v548 = vpop.permute.xlu0 %547
    %549 = vrot.lane.b32.xlu0 %v546, 17
    %v550 = vpop.permute.xlu0 %549
    %v551 = vsel %vm34, %v548, %v550
    %v552 = vsel %vm34, %v550, %v548
    %v553 = vmul.f32 %v552, %v37
    %v554 = vmul.f32 %v551, %v38
    %v555 = vld [vmem:[%s4] sm:$0xff]
    %556 = vrot.lane.b32.xlu0 %v545, 16
    %v557 = vpop.permute.xlu0 %556
    %558 = vrot.lane.b32.xlu0 %v546, 16
    %v559 = vpop.permute.xlu0 %558
    %v560 = vsel %vm46, %v557, %v559
    %v561 = vsel %vm46, %v559, %v557
    %v562 = vmul.f32 %v561, %v49
    %v563 = vmul.f32 %v560, %v50
    %s564 = scalar_lea.vmem %s4, 8
    %v565 = vld [vmem:[%s564] sm:$0xff]
    %v567 = vsel %vm55, %v565, 0
    %569 = vmatpush.msra.mxu0 0.0
    %570 = vmatpush.msra.mxu0 0.0
    %571 = vmatpush.msra.mxu0 0.0
    %572 = vmatpush.msra.mxu0 0.0
    %573 = vmatpush.msra.mxu0 0.0
    %574 = vmatpush.msra.mxu0 0.0
    %575 = vmatpush.msra.mxu0 0.0
    %576 = vmatpush.msra.mxu0 0.0
    %577 = vmatpush.msra.mxu0 0.0
    %578 = vmatpush.msra.mxu0 0.0
    %579 = vmatpush.msra.mxu0 0.0
    %580 = vmatpush.msra.mxu0 0.0
    %581 = vmatpush.msra.mxu0 0.0
    %582 = vmatpush.msra.mxu0 0.0
    %583 = vmatpush.msra.mxu0 0.0
    %584 = vmatpush.msra.mxu0 %v562
    %585 = vmatmul.f32.gmra.mxu0 %v567
    %v586 = vpop.f32.mrf.mxu0
    %v587 = vadd.f32 0.0, %v586
    %588 = vdwg.mxu0
    %589 = vmatpush.msra.mxu0 0.0
    %590 = vmatpush.msra.mxu0 0.0
    %591 = vmatpush.msra.mxu0 0.0
    %592 = vmatpush.msra.mxu0 0.0
    %593 = vmatpush.msra.mxu0 0.0
    %594 = vmatpush.msra.mxu0 0.0
    %595 = vmatpush.msra.mxu0 0.0
    %596 = vmatpush.msra.mxu0 0.0
    %597 = vmatpush.msra.mxu0 0.0
    %598 = vmatpush.msra.mxu0 0.0
    %599 = vmatpush.msra.mxu0 0.0
    %600 = vmatpush.msra.mxu0 0.0
    %601 = vmatpush.msra.mxu0 0.0
    %602 = vmatpush.msra.mxu0 0.0
    %603 = vmatpush.msra.mxu0 0.0
    %604 = vmatpush.msra.mxu0 %v563
    %605 = vmatmul.f32.gmra.mxu0 %v567
    %v606 = vpop.f32.mrf.mxu0
    %v607 = vadd.f32 0.0, %v606
    %608 = vdwg.mxu0
    %v610 = vsel %vm55, %v555, 0
    %612 = vmatpush.msra.mxu0 0.0
    %613 = vmatpush.msra.mxu0 0.0
    %614 = vmatpush.msra.mxu0 0.0
    %615 = vmatpush.msra.mxu0 0.0
    %616 = vmatpush.msra.mxu0 0.0
    %617 = vmatpush.msra.mxu0 0.0
    %618 = vmatpush.msra.mxu0 0.0
    %619 = vmatpush.msra.mxu0 0.0
    %620 = vmatpush.msra.mxu0 0.0
    %621 = vmatpush.msra.mxu0 0.0
    %622 = vmatpush.msra.mxu0 0.0
    %623 = vmatpush.msra.mxu0 0.0
    %624 = vmatpush.msra.mxu0 0.0
    %625 = vmatpush.msra.mxu0 0.0
    %626 = vmatpush.msra.mxu0 0.0
    %627 = vmatpush.msra.mxu0 %v553
    %628 = vmatmul.f32.gmra.mxu0 %v610
    %v629 = vpop.f32.mrf.mxu0
    %v630 = vadd.f32 %v587, %v629
    %631 = vdwg.mxu0
    %632 = vmatpush.msra.mxu0 0.0
    %633 = vmatpush.msra.mxu0 0.0
    %634 = vmatpush.msra.mxu0 0.0
    %635 = vmatpush.msra.mxu0 0.0
    %636 = vmatpush.msra.mxu0 0.0
    %637 = vmatpush.msra.mxu0 0.0
    %638 = vmatpush.msra.mxu0 0.0
    %639 = vmatpush.msra.mxu0 0.0
    %640 = vmatpush.msra.mxu0 0.0
    %641 = vmatpush.msra.mxu0 0.0
    %642 = vmatpush.msra.mxu0 0.0
    %643 = vmatpush.msra.mxu0 0.0
    %644 = vmatpush.msra.mxu0 0.0
    %645 = vmatpush.msra.mxu0 0.0
    %646 = vmatpush.msra.mxu0 0.0
    %647 = vmatpush.msra.mxu0 %v554
    %648 = vmatmul.f32.gmra.mxu0 %v610
    %v649 = vpop.f32.mrf.mxu0
    %v650 = vadd.f32 %v607, %v649
    %651 = vdwg.mxu0
    %652 = vrot.lane.b32.xlu0 %v545, 15
    %v653 = vpop.permute.xlu0 %652
    %654 = vrot.lane.b32.xlu0 %v546, 15
    %v655 = vpop.permute.xlu0 %654
    %v656 = vsel %vm146, %v653, %v655
    %v657 = vsel %vm146, %v655, %v653
    %v658 = vmul.f32 %v657, %v149
    %v659 = vmul.f32 %v656, %v150
    %s660 = scalar_lea.vmem %s4, 16
    %v661 = vld [vmem:[%s660] sm:$0xff]
    %v663 = vsel %vm55, %v661, 0
    %665 = vmatpush.msra.mxu0 0.0
    %666 = vmatpush.msra.mxu0 0.0
    %667 = vmatpush.msra.mxu0 0.0
    %668 = vmatpush.msra.mxu0 0.0
    %669 = vmatpush.msra.mxu0 0.0
    %670 = vmatpush.msra.mxu0 0.0
    %671 = vmatpush.msra.mxu0 0.0
    %672 = vmatpush.msra.mxu0 0.0
    %673 = vmatpush.msra.mxu0 0.0
    %674 = vmatpush.msra.mxu0 0.0
    %675 = vmatpush.msra.mxu0 0.0
    %676 = vmatpush.msra.mxu0 0.0
    %677 = vmatpush.msra.mxu0 0.0
    %678 = vmatpush.msra.mxu0 0.0
    %679 = vmatpush.msra.mxu0 0.0
    %680 = vmatpush.msra.mxu0 %v658
    %681 = vmatmul.f32.gmra.mxu0 %v663
    %v682 = vpop.f32.mrf.mxu0
    %v683 = vadd.f32 0.0, %v682
    %684 = vdwg.mxu0
    %685 = vmatpush.msra.mxu0 0.0
    %686 = vmatpush.msra.mxu0 0.0
    %687 = vmatpush.msra.mxu0 0.0
    %688 = vmatpush.msra.mxu0 0.0
    %689 = vmatpush.msra.mxu0 0.0
    %690 = vmatpush.msra.mxu0 0.0
    %691 = vmatpush.msra.mxu0 0.0
    %692 = vmatpush.msra.mxu0 0.0
    %693 = vmatpush.msra.mxu0 0.0
    %694 = vmatpush.msra.mxu0 0.0
    %695 = vmatpush.msra.mxu0 0.0
    %696 = vmatpush.msra.mxu0 0.0
    %697 = vmatpush.msra.mxu0 0.0
    %698 = vmatpush.msra.mxu0 0.0
    %699 = vmatpush.msra.mxu0 0.0
    %700 = vmatpush.msra.mxu0 %v659
    %701 = vmatmul.f32.gmra.mxu0 %v663
    %v702 = vpop.f32.mrf.mxu0
    %v703 = vadd.f32 0.0, %v702
    %704 = vdwg.mxu0
    %v705 = vadd.f32 %v630, %v683
    %v706 = vadd.f32 %v650, %v703
    %707 = vrot.lane.b32.xlu0 %v545, 1
    %v708 = vpop.permute.xlu0 %707
    %709 = vrot.lane.b32.xlu0 %v546, 1
    %v710 = vpop.permute.xlu0 %709
    %v711 = vsel %vm204, %v708, %v710
    %v712 = vsel %vm204, %v710, %v708
    %v713 = vmul.f32 %v712, %v207
    %v714 = vmul.f32 %v711, %v208
    %s715 = scalar_lea.vmem %s4, 24
    %v716 = vld [vmem:[%s715] sm:$0xff]
    %v718 = vsel %vm55, %v716, 0
    %720 = vmatpush.msra.mxu0 0.0
    %721 = vmatpush.msra.mxu0 0.0
    %722 = vmatpush.msra.mxu0 0.0
    %723 = vmatpush.msra.mxu0 0.0
    %724 = vmatpush.msra.mxu0 0.0
    %725 = vmatpush.msra.mxu0 0.0
    %726 = vmatpush.msra.mxu0 0.0
    %727 = vmatpush.msra.mxu0 0.0
    %728 = vmatpush.msra.mxu0 0.0
    %729 = vmatpush.msra.mxu0 0.0
    %730 = vmatpush.msra.mxu0 0.0
    %731 = vmatpush.msra.mxu0 0.0
    %732 = vmatpush.msra.mxu0 0.0
    %733 = vmatpush.msra.mxu0 0.0
    %734 = vmatpush.msra.mxu0 0.0
    %735 = vmatpush.msra.mxu0 %v713
    %736 = vmatmul.f32.gmra.mxu0 %v718
    %v737 = vpop.f32.mrf.mxu0
    %v738 = vadd.f32 0.0, %v737
    %739 = vdwg.mxu0
    %740 = vmatpush.msra.mxu0 0.0
    %741 = vmatpush.msra.mxu0 0.0
    %742 = vmatpush.msra.mxu0 0.0
    %743 = vmatpush.msra.mxu0 0.0
    %744 = vmatpush.msra.mxu0 0.0
    %745 = vmatpush.msra.mxu0 0.0
    %746 = vmatpush.msra.mxu0 0.0
    %747 = vmatpush.msra.mxu0 0.0
    %748 = vmatpush.msra.mxu0 0.0
    %749 = vmatpush.msra.mxu0 0.0
    %750 = vmatpush.msra.mxu0 0.0
    %751 = vmatpush.msra.mxu0 0.0
    %752 = vmatpush.msra.mxu0 0.0
    %753 = vmatpush.msra.mxu0 0.0
    %754 = vmatpush.msra.mxu0 0.0
    %755 = vmatpush.msra.mxu0 %v714
    %756 = vmatmul.f32.gmra.mxu0 %v718
    %v757 = vpop.f32.mrf.mxu0
    %v758 = vadd.f32 0.0, %v757
    %759 = vdwg.mxu0
    %v760 = vadd.f32 %v705, %v738
    %v761 = vadd.f32 %v706, %v758
    %s762 = scalar_lea.vmem %s4, 32
    %v763 = vld [vmem:[%s762] sm:$0xff]
    %v765 = vsel %vm55, %v763, 0
    %767 = vmatpush.msra.mxu0 0.0
    %768 = vmatpush.msra.mxu0 0.0
    %769 = vmatpush.msra.mxu0 0.0
    %770 = vmatpush.msra.mxu0 0.0
    %771 = vmatpush.msra.mxu0 0.0
    %772 = vmatpush.msra.mxu0 0.0
    %773 = vmatpush.msra.mxu0 0.0
    %774 = vmatpush.msra.mxu0 0.0
    %775 = vmatpush.msra.mxu0 0.0
    %776 = vmatpush.msra.mxu0 0.0
    %777 = vmatpush.msra.mxu0 0.0
    %778 = vmatpush.msra.mxu0 0.0
    %779 = vmatpush.msra.mxu0 0.0
    %780 = vmatpush.msra.mxu0 0.0
    %781 = vmatpush.msra.mxu0 0.0
    %782 = vmatpush.msra.mxu0 %v545
    %783 = vmatmul.f32.gmra.mxu0 %v765
    %v784 = vpop.f32.mrf.mxu0
    %v785 = vadd.f32 0.0, %v784
    %786 = vdwg.mxu0
    %787 = vmatpush.msra.mxu0 0.0
    %788 = vmatpush.msra.mxu0 0.0
    %789 = vmatpush.msra.mxu0 0.0
    %790 = vmatpush.msra.mxu0 0.0
    %791 = vmatpush.msra.mxu0 0.0
    %792 = vmatpush.msra.mxu0 0.0
    %793 = vmatpush.msra.mxu0 0.0
    %794 = vmatpush.msra.mxu0 0.0
    %795 = vmatpush.msra.mxu0 0.0
    %796 = vmatpush.msra.mxu0 0.0
    %797 = vmatpush.msra.mxu0 0.0
    %798 = vmatpush.msra.mxu0 0.0
    %799 = vmatpush.msra.mxu0 0.0
    %800 = vmatpush.msra.mxu0 0.0
    %801 = vmatpush.msra.mxu0 0.0
    %802 = vmatpush.msra.mxu0 %v546
    %803 = vmatmul.f32.gmra.mxu0 %v765
    %v804 = vpop.f32.mrf.mxu0
    %v805 = vadd.f32 0.0, %v804
    %806 = vdwg.mxu0
    %v807 = vadd.f32 %v760, %v785
    %v808 = vadd.f32 %v761, %v805
    %809 = vrot.lane.b32.xlu0 %v545, 127
    %v810 = vpop.permute.xlu0 %809
    %811 = vrot.lane.b32.xlu0 %v546, 127
    %v812 = vpop.permute.xlu0 %811
    %v813 = vsel %vm309, %v810, %v812
    %v814 = vsel %vm309, %v812, %v810
    %v815 = vmul.f32 %v813, %v312
    %v816 = vmul.f32 %v814, %v313
    %s817 = scalar_lea.vmem %s4, 40
    %v818 = vld [vmem:[%s817] sm:$0xff]
    %v820 = vsel %vm55, %v818, 0
    %822 = vmatpush.msra.mxu0 0.0
    %823 = vmatpush.msra.mxu0 0.0
    %824 = vmatpush.msra.mxu0 0.0
    %825 = vmatpush.msra.mxu0 0.0
    %826 = vmatpush.msra.mxu0 0.0
    %827 = vmatpush.msra.mxu0 0.0
    %828 = vmatpush.msra.mxu0 0.0
    %829 = vmatpush.msra.mxu0 0.0
    %830 = vmatpush.msra.mxu0 0.0
    %831 = vmatpush.msra.mxu0 0.0
    %832 = vmatpush.msra.mxu0 0.0
    %833 = vmatpush.msra.mxu0 0.0
    %834 = vmatpush.msra.mxu0 0.0
    %835 = vmatpush.msra.mxu0 0.0
    %836 = vmatpush.msra.mxu0 0.0
    %837 = vmatpush.msra.mxu0 %v815
    %838 = vmatmul.f32.gmra.mxu0 %v820
    %v839 = vpop.f32.mrf.mxu0
    %v840 = vadd.f32 0.0, %v839
    %841 = vdwg.mxu0
    %842 = vmatpush.msra.mxu0 0.0
    %843 = vmatpush.msra.mxu0 0.0
    %844 = vmatpush.msra.mxu0 0.0
    %845 = vmatpush.msra.mxu0 0.0
    %846 = vmatpush.msra.mxu0 0.0
    %847 = vmatpush.msra.mxu0 0.0
    %848 = vmatpush.msra.mxu0 0.0
    %849 = vmatpush.msra.mxu0 0.0
    %850 = vmatpush.msra.mxu0 0.0
    %851 = vmatpush.msra.mxu0 0.0
    %852 = vmatpush.msra.mxu0 0.0
    %853 = vmatpush.msra.mxu0 0.0
    %854 = vmatpush.msra.mxu0 0.0
    %855 = vmatpush.msra.mxu0 0.0
    %856 = vmatpush.msra.mxu0 0.0
    %857 = vmatpush.msra.mxu0 %v816
    %858 = vmatmul.f32.gmra.mxu0 %v820
    %v859 = vpop.f32.mrf.mxu0
    %v860 = vadd.f32 0.0, %v859
    %861 = vdwg.mxu0
    %v862 = vadd.f32 %v807, %v840
    %v863 = vadd.f32 %v808, %v860
    %864 = vrot.lane.b32.xlu0 %v545, 113
    %v865 = vpop.permute.xlu0 %864
    %866 = vrot.lane.b32.xlu0 %v546, 113
    %v867 = vpop.permute.xlu0 %866
    %v868 = vsel %vm367, %v865, %v867
    %v869 = vsel %vm367, %v867, %v865
    %v870 = vmul.f32 %v868, %v370
    %v871 = vmul.f32 %v869, %v371
    %s872 = scalar_lea.vmem %s4, 48
    %v873 = vld [vmem:[%s872] sm:$0xff]
    %v875 = vsel %vm55, %v873, 0
    %877 = vmatpush.msra.mxu0 0.0
    %878 = vmatpush.msra.mxu0 0.0
    %879 = vmatpush.msra.mxu0 0.0
    %880 = vmatpush.msra.mxu0 0.0
    %881 = vmatpush.msra.mxu0 0.0
    %882 = vmatpush.msra.mxu0 0.0
    %883 = vmatpush.msra.mxu0 0.0
    %884 = vmatpush.msra.mxu0 0.0
    %885 = vmatpush.msra.mxu0 0.0
    %886 = vmatpush.msra.mxu0 0.0
    %887 = vmatpush.msra.mxu0 0.0
    %888 = vmatpush.msra.mxu0 0.0
    %889 = vmatpush.msra.mxu0 0.0
    %890 = vmatpush.msra.mxu0 0.0
    %891 = vmatpush.msra.mxu0 0.0
    %892 = vmatpush.msra.mxu0 %v870
    %893 = vmatmul.f32.gmra.mxu0 %v875
    %v894 = vpop.f32.mrf.mxu0
    %v895 = vadd.f32 0.0, %v894
    %896 = vdwg.mxu0
    %897 = vmatpush.msra.mxu0 0.0
    %898 = vmatpush.msra.mxu0 0.0
    %899 = vmatpush.msra.mxu0 0.0
    %900 = vmatpush.msra.mxu0 0.0
    %901 = vmatpush.msra.mxu0 0.0
    %902 = vmatpush.msra.mxu0 0.0
    %903 = vmatpush.msra.mxu0 0.0
    %904 = vmatpush.msra.mxu0 0.0
    %905 = vmatpush.msra.mxu0 0.0
    %906 = vmatpush.msra.mxu0 0.0
    %907 = vmatpush.msra.mxu0 0.0
    %908 = vmatpush.msra.mxu0 0.0
    %909 = vmatpush.msra.mxu0 0.0
    %910 = vmatpush.msra.mxu0 0.0
    %911 = vmatpush.msra.mxu0 0.0
    %912 = vmatpush.msra.mxu0 %v871
    %913 = vmatmul.f32.gmra.mxu0 %v875
    %v914 = vpop.f32.mrf.mxu0
    %v915 = vadd.f32 0.0, %v914
    %916 = vdwg.mxu0
    %v917 = vadd.f32 %v862, %v895
    %v918 = vadd.f32 %v863, %v915
    %919 = vrot.lane.b32.xlu0 %v545, 112
    %v920 = vpop.permute.xlu0 %919
    %921 = vrot.lane.b32.xlu0 %v546, 112
    %v922 = vpop.permute.xlu0 %921
    %v923 = vsel %vm425, %v920, %v922
    %v924 = vsel %vm425, %v922, %v920
    %v925 = vmul.f32 %v923, %v428
    %v926 = vmul.f32 %v924, %v429
    %s927 = scalar_lea.vmem %s4, 56
    %v928 = vld [vmem:[%s927] sm:$0xff]
    %v930 = vsel %vm55, %v928, 0
    %932 = vmatpush.msra.mxu0 0.0
    %933 = vmatpush.msra.mxu0 0.0
    %934 = vmatpush.msra.mxu0 0.0
    %935 = vmatpush.msra.mxu0 0.0
    %936 = vmatpush.msra.mxu0 0.0
    %937 = vmatpush.msra.mxu0 0.0
    %938 = vmatpush.msra.mxu0 0.0
    %939 = vmatpush.msra.mxu0 0.0
    %940 = vmatpush.msra.mxu0 0.0
    %941 = vmatpush.msra.mxu0 0.0
    %942 = vmatpush.msra.mxu0 0.0
    %943 = vmatpush.msra.mxu0 0.0
    %944 = vmatpush.msra.mxu0 0.0
    %945 = vmatpush.msra.mxu0 0.0
    %946 = vmatpush.msra.mxu0 0.0
    %947 = vmatpush.msra.mxu0 %v925
    %948 = vmatmul.f32.gmra.mxu0 %v930
    %v949 = vpop.f32.mrf.mxu0
    %v950 = vadd.f32 0.0, %v949
    %951 = vdwg.mxu0
    %952 = vmatpush.msra.mxu0 0.0
    %953 = vmatpush.msra.mxu0 0.0
    %954 = vmatpush.msra.mxu0 0.0
    %955 = vmatpush.msra.mxu0 0.0
    %956 = vmatpush.msra.mxu0 0.0
    %957 = vmatpush.msra.mxu0 0.0
    %958 = vmatpush.msra.mxu0 0.0
    %959 = vmatpush.msra.mxu0 0.0
    %960 = vmatpush.msra.mxu0 0.0
    %961 = vmatpush.msra.mxu0 0.0
    %962 = vmatpush.msra.mxu0 0.0
    %963 = vmatpush.msra.mxu0 0.0
    %964 = vmatpush.msra.mxu0 0.0
    %965 = vmatpush.msra.mxu0 0.0
    %966 = vmatpush.msra.mxu0 0.0
    %967 = vmatpush.msra.mxu0 %v926
    %968 = vmatmul.f32.gmra.mxu0 %v930
    %v969 = vpop.f32.mrf.mxu0
    %v970 = vadd.f32 0.0, %v969
    %971 = vdwg.mxu0
    %v972 = vadd.f32 %v917, %v950
    %v973 = vadd.f32 %v918, %v970
    %974 = vrot.lane.b32.xlu0 %v545, 111
    %v975 = vpop.permute.xlu0 %974
    %976 = vrot.lane.b32.xlu0 %v546, 111
    %v977 = vpop.permute.xlu0 %976
    %v978 = vsel %vm483, %v975, %v977
    %v979 = vsel %vm483, %v977, %v975
    %v980 = vmul.f32 %v978, %v486
    %v981 = vmul.f32 %v979, %v487
    %s982 = scalar_lea.vmem %s4, 64
    %v983 = vld [vmem:[%s982] sm:$0xff]
    %v985 = vsel %vm55, %v983, 0
    %987 = vmatpush.msra.mxu0 0.0
    %988 = vmatpush.msra.mxu0 0.0
    %989 = vmatpush.msra.mxu0 0.0
    %990 = vmatpush.msra.mxu0 0.0
    %991 = vmatpush.msra.mxu0 0.0
    %992 = vmatpush.msra.mxu0 0.0
    %993 = vmatpush.msra.mxu0 0.0
    %994 = vmatpush.msra.mxu0 0.0
    %995 = vmatpush.msra.mxu0 0.0
    %996 = vmatpush.msra.mxu0 0.0
    %997 = vmatpush.msra.mxu0 0.0
    %998 = vmatpush.msra.mxu0 0.0
    %999 = vmatpush.msra.mxu0 0.0
    %1000 = vmatpush.msra.mxu0 0.0
    %1001 = vmatpush.msra.mxu0 0.0
    %1002 = vmatpush.msra.mxu0 %v980
    %1003 = vmatmul.f32.gmra.mxu0 %v985
    %v1004 = vpop.f32.mrf.mxu0
    %v1005 = vadd.f32 0.0, %v1004
    %1006 = vdwg.mxu0
    %1007 = vmatpush.msra.mxu0 0.0
    %1008 = vmatpush.msra.mxu0 0.0
    %1009 = vmatpush.msra.mxu0 0.0
    %1010 = vmatpush.msra.mxu0 0.0
    %1011 = vmatpush.msra.mxu0 0.0
    %1012 = vmatpush.msra.mxu0 0.0
    %1013 = vmatpush.msra.mxu0 0.0
    %1014 = vmatpush.msra.mxu0 0.0
    %1015 = vmatpush.msra.mxu0 0.0
    %1016 = vmatpush.msra.mxu0 0.0
    %1017 = vmatpush.msra.mxu0 0.0
    %1018 = vmatpush.msra.mxu0 0.0
    %1019 = vmatpush.msra.mxu0 0.0
    %1020 = vmatpush.msra.mxu0 0.0
    %1021 = vmatpush.msra.mxu0 0.0
    %1022 = vmatpush.msra.mxu0 %v981
    %1023 = vmatmul.f32.gmra.mxu0 %v985
    %v1024 = vpop.f32.mrf.mxu0
    %v1025 = vadd.f32 0.0, %v1024
    %1026 = vdwg.mxu0
    %v1027 = vadd.f32 %v972, %v1005
    %v1028 = vadd.f32 %v973, %v1025
    %v1029 = vld [vmem:[%s5] sm:$0xff]
    %1031 = vset.pattern.permute.xlu0 0
    %1032 = vperm.xlu0 %1031, %v1029
    %v1033 = vpop.permute.xlu0 %1032
    %v1035 = vadd.f32 %v1027, %v1033
    %v1036 = vadd.f32 %v1028, %v1033
    %v1037 = vadd.f32 %v1035, %v26
    %v1038 = vadd.f32 %v1036, %v27
    %v1039 = vmax.f32 %v1037, 0.0
    %v1040 = vmax.f32 %v1038, 0.0
    %1041 = vst [vmem:[#allocation2] sm:$0xff] %v1039
    %1042 = vst [vmem:[#allocation2 + $0x8] sm:$0xff] %v1040
    %s1043 = scalar_lea.vmem %s0, 16
    %v1044 = vld [vmem:[%s1043] sm:$0xff]
    %v1045 = vld [vmem:[%s1043 + $0x8] sm:$0xff]
    %1046 = vrot.lane.b32.xlu0 %v1044, 17
    %v1047 = vpop.permute.xlu0 %1046
    %1048 = vrot.lane.b32.xlu0 %v1045, 17
    %v1049 = vpop.permute.xlu0 %1048
    %v1050 = vsel %vm34, %v1047, %v1049
    %v1051 = vsel %vm34, %v1049, %v1047
    %v1052 = vmul.f32 %v1051, %v37
    %v1053 = vmul.f32 %v1050, %v38
    %v1054 = vld [vmem:[%s2] sm:$0xff]
    %1055 = vrot.lane.b32.xlu0 %v1044, 16
    %v1056 = vpop.permute.xlu0 %1055
    %1057 = vrot.lane.b32.xlu0 %v1045, 16
    %v1058 = vpop.permute.xlu0 %1057
    %v1059 = vsel %vm46, %v1056, %v1058
    %v1060 = vsel %vm46, %v1058, %v1056
    %v1061 = vmul.f32 %v1060, %v49
    %v1062 = vmul.f32 %v1059, %v50
    %v1063 = vld [vmem:[%s53] sm:$0xff]
    %v1065 = vsel %vm55, %v1063, 0
    %1067 = vmatpush.msra.mxu0 0.0
    %1068 = vmatpush.msra.mxu0 0.0
    %1069 = vmatpush.msra.mxu0 0.0
    %1070 = vmatpush.msra.mxu0 0.0
    %1071 = vmatpush.msra.mxu0 0.0
    %1072 = vmatpush.msra.mxu0 0.0
    %1073 = vmatpush.msra.mxu0 0.0
    %1074 = vmatpush.msra.mxu0 0.0
    %1075 = vmatpush.msra.mxu0 0.0
    %1076 = vmatpush.msra.mxu0 0.0
    %1077 = vmatpush.msra.mxu0 0.0
    %1078 = vmatpush.msra.mxu0 0.0
    %1079 = vmatpush.msra.mxu0 0.0
    %1080 = vmatpush.msra.mxu0 0.0
    %1081 = vmatpush.msra.mxu0 0.0
    %1082 = vmatpush.msra.mxu0 %v1061
    %1083 = vmatmul.f32.gmra.mxu0 %v1065
    %v1084 = vpop.f32.mrf.mxu0
    %v1085 = vadd.f32 0.0, %v1084
    %1086 = vdwg.mxu0
    %1087 = vmatpush.msra.mxu0 0.0
    %1088 = vmatpush.msra.mxu0 0.0
    %1089 = vmatpush.msra.mxu0 0.0
    %1090 = vmatpush.msra.mxu0 0.0
    %1091 = vmatpush.msra.mxu0 0.0
    %1092 = vmatpush.msra.mxu0 0.0
    %1093 = vmatpush.msra.mxu0 0.0
    %1094 = vmatpush.msra.mxu0 0.0
    %1095 = vmatpush.msra.mxu0 0.0
    %1096 = vmatpush.msra.mxu0 0.0
    %1097 = vmatpush.msra.mxu0 0.0
    %1098 = vmatpush.msra.mxu0 0.0
    %1099 = vmatpush.msra.mxu0 0.0
    %1100 = vmatpush.msra.mxu0 0.0
    %1101 = vmatpush.msra.mxu0 0.0
    %1102 = vmatpush.msra.mxu0 %v1062
    %1103 = vmatmul.f32.gmra.mxu0 %v1065
    %v1104 = vpop.f32.mrf.mxu0
    %v1105 = vadd.f32 0.0, %v1104
    %1106 = vdwg.mxu0
    %v1108 = vsel %vm55, %v1054, 0
    %1110 = vmatpush.msra.mxu0 0.0
    %1111 = vmatpush.msra.mxu0 0.0
    %1112 = vmatpush.msra.mxu0 0.0
    %1113 = vmatpush.msra.mxu0 0.0
    %1114 = vmatpush.msra.mxu0 0.0
    %1115 = vmatpush.msra.mxu0 0.0
    %1116 = vmatpush.msra.mxu0 0.0
    %1117 = vmatpush.msra.mxu0 0.0
    %1118 = vmatpush.msra.mxu0 0.0
    %1119 = vmatpush.msra.mxu0 0.0
    %1120 = vmatpush.msra.mxu0 0.0
    %1121 = vmatpush.msra.mxu0 0.0
    %1122 = vmatpush.msra.mxu0 0.0
    %1123 = vmatpush.msra.mxu0 0.0
    %1124 = vmatpush.msra.mxu0 0.0
    %1125 = vmatpush.msra.mxu0 %v1052
    %1126 = vmatmul.f32.gmra.mxu0 %v1108
    %v1127 = vpop.f32.mrf.mxu0
    %v1128 = vadd.f32 %v1085, %v1127
    %1129 = vdwg.mxu0
    %1130 = vmatpush.msra.mxu0 0.0
    %1131 = vmatpush.msra.mxu0 0.0
    %1132 = vmatpush.msra.mxu0 0.0
    %1133 = vmatpush.msra.mxu0 0.0
    %1134 = vmatpush.msra.mxu0 0.0
    %1135 = vmatpush.msra.mxu0 0.0
    %1136 = vmatpush.msra.mxu0 0.0
    %1137 = vmatpush.msra.mxu0 0.0
    %1138 = vmatpush.msra.mxu0 0.0
    %1139 = vmatpush.msra.mxu0 0.0
    %1140 = vmatpush.msra.mxu0 0.0
    %1141 = vmatpush.msra.mxu0 0.0
    %1142 = vmatpush.msra.mxu0 0.0
    %1143 = vmatpush.msra.mxu0 0.0
    %1144 = vmatpush.msra.mxu0 0.0
    %1145 = vmatpush.msra.mxu0 %v1053
    %1146 = vmatmul.f32.gmra.mxu0 %v1108
    %v1147 = vpop.f32.mrf.mxu0
    %v1148 = vadd.f32 %v1105, %v1147
    %1149 = vdwg.mxu0
    %1150 = vrot.lane.b32.xlu0 %v1044, 15
    %v1151 = vpop.permute.xlu0 %1150
    %1152 = vrot.lane.b32.xlu0 %v1045, 15
    %v1153 = vpop.permute.xlu0 %1152
    %v1154 = vsel %vm146, %v1151, %v1153
    %v1155 = vsel %vm146, %v1153, %v1151
    %v1156 = vmul.f32 %v1155, %v149
    %v1157 = vmul.f32 %v1154, %v150
    %v1158 = vld [vmem:[%s153] sm:$0xff]
    %v1160 = vsel %vm55, %v1158, 0
    %1162 = vmatpush.msra.mxu0 0.0
    %1163 = vmatpush.msra.mxu0 0.0
    %1164 = vmatpush.msra.mxu0 0.0
    %1165 = vmatpush.msra.mxu0 0.0
    %1166 = vmatpush.msra.mxu0 0.0
    %1167 = vmatpush.msra.mxu0 0.0
    %1168 = vmatpush.msra.mxu0 0.0
    %1169 = vmatpush.msra.mxu0 0.0
    %1170 = vmatpush.msra.mxu0 0.0
    %1171 = vmatpush.msra.mxu0 0.0
    %1172 = vmatpush.msra.mxu0 0.0
    %1173 = vmatpush.msra.mxu0 0.0
    %1174 = vmatpush.msra.mxu0 0.0
    %1175 = vmatpush.msra.mxu0 0.0
    %1176 = vmatpush.msra.mxu0 0.0
    %1177 = vmatpush.msra.mxu0 %v1156
    %1178 = vmatmul.f32.gmra.mxu0 %v1160
    %v1179 = vpop.f32.mrf.mxu0
    %v1180 = vadd.f32 0.0, %v1179
    %1181 = vdwg.mxu0
    %1182 = vmatpush.msra.mxu0 0.0
    %1183 = vmatpush.msra.mxu0 0.0
    %1184 = vmatpush.msra.mxu0 0.0
    %1185 = vmatpush.msra.mxu0 0.0
    %1186 = vmatpush.msra.mxu0 0.0
    %1187 = vmatpush.msra.mxu0 0.0
    %1188 = vmatpush.msra.mxu0 0.0
    %1189 = vmatpush.msra.mxu0 0.0
    %1190 = vmatpush.msra.mxu0 0.0
    %1191 = vmatpush.msra.mxu0 0.0
    %1192 = vmatpush.msra.mxu0 0.0
    %1193 = vmatpush.msra.mxu0 0.0
    %1194 = vmatpush.msra.mxu0 0.0
    %1195 = vmatpush.msra.mxu0 0.0
    %1196 = vmatpush.msra.mxu0 0.0
    %1197 = vmatpush.msra.mxu0 %v1157
    %1198 = vmatmul.f32.gmra.mxu0 %v1160
    %v1199 = vpop.f32.mrf.mxu0
    %v1200 = vadd.f32 0.0, %v1199
    %1201 = vdwg.mxu0
    %v1202 = vadd.f32 %v1128, %v1180
    %v1203 = vadd.f32 %v1148, %v1200
    %1204 = vrot.lane.b32.xlu0 %v1044, 1
    %v1205 = vpop.permute.xlu0 %1204
    %1206 = vrot.lane.b32.xlu0 %v1045, 1
    %v1207 = vpop.permute.xlu0 %1206
    %v1208 = vsel %vm204, %v1205, %v1207
    %v1209 = vsel %vm204, %v1207, %v1205
    %v1210 = vmul.f32 %v1209, %v207
    %v1211 = vmul.f32 %v1208, %v208
    %v1212 = vld [vmem:[%s211] sm:$0xff]
    %v1214 = vsel %vm55, %v1212, 0
    %1216 = vmatpush.msra.mxu0 0.0
    %1217 = vmatpush.msra.mxu0 0.0
    %1218 = vmatpush.msra.mxu0 0.0
    %1219 = vmatpush.msra.mxu0 0.0
    %1220 = vmatpush.msra.mxu0 0.0
    %1221 = vmatpush.msra.mxu0 0.0
    %1222 = vmatpush.msra.mxu0 0.0
    %1223 = vmatpush.msra.mxu0 0.0
    %1224 = vmatpush.msra.mxu0 0.0
    %1225 = vmatpush.msra.mxu0 0.0
    %1226 = vmatpush.msra.mxu0 0.0
    %1227 = vmatpush.msra.mxu0 0.0
    %1228 = vmatpush.msra.mxu0 0.0
    %1229 = vmatpush.msra.mxu0 0.0
    %1230 = vmatpush.msra.mxu0 0.0
    %1231 = vmatpush.msra.mxu0 %v1210
    %1232 = vmatmul.f32.gmra.mxu0 %v1214
    %v1233 = vpop.f32.mrf.mxu0
    %v1234 = vadd.f32 0.0, %v1233
    %1235 = vdwg.mxu0
    %1236 = vmatpush.msra.mxu0 0.0
    %1237 = vmatpush.msra.mxu0 0.0
    %1238 = vmatpush.msra.mxu0 0.0
    %1239 = vmatpush.msra.mxu0 0.0
    %1240 = vmatpush.msra.mxu0 0.0
    %1241 = vmatpush.msra.mxu0 0.0
    %1242 = vmatpush.msra.mxu0 0.0
    %1243 = vmatpush.msra.mxu0 0.0
    %1244 = vmatpush.msra.mxu0 0.0
    %1245 = vmatpush.msra.mxu0 0.0
    %1246 = vmatpush.msra.mxu0 0.0
    %1247 = vmatpush.msra.mxu0 0.0
    %1248 = vmatpush.msra.mxu0 0.0
    %1249 = vmatpush.msra.mxu0 0.0
    %1250 = vmatpush.msra.mxu0 0.0
    %1251 = vmatpush.msra.mxu0 %v1211
    %1252 = vmatmul.f32.gmra.mxu0 %v1214
    %v1253 = vpop.f32.mrf.mxu0
    %v1254 = vadd.f32 0.0, %v1253
    %1255 = vdwg.mxu0
    %v1256 = vadd.f32 %v1202, %v1234
    %v1257 = vadd.f32 %v1203, %v1254
    %v1258 = vld [vmem:[%s258] sm:$0xff]
    %v1260 = vsel %vm55, %v1258, 0
    %1262 = vmatpush.msra.mxu0 0.0
    %1263 = vmatpush.msra.mxu0 0.0
    %1264 = vmatpush.msra.mxu0 0.0
    %1265 = vmatpush.msra.mxu0 0.0
    %1266 = vmatpush.msra.mxu0 0.0
    %1267 = vmatpush.msra.mxu0 0.0
    %1268 = vmatpush.msra.mxu0 0.0
    %1269 = vmatpush.msra.mxu0 0.0
    %1270 = vmatpush.msra.mxu0 0.0
    %1271 = vmatpush.msra.mxu0 0.0
    %1272 = vmatpush.msra.mxu0 0.0
    %1273 = vmatpush.msra.mxu0 0.0
    %1274 = vmatpush.msra.mxu0 0.0
    %1275 = vmatpush.msra.mxu0 0.0
    %1276 = vmatpush.msra.mxu0 0.0
    %1277 = vmatpush.msra.mxu0 %v1044
    %1278 = vmatmul.f32.gmra.mxu0 %v1260
    %v1279 = vpop.f32.mrf.mxu0
    %v1280 = vadd.f32 0.0, %v1279
    %1281 = vdwg.mxu0
    %1282 = vmatpush.msra.mxu0 0.0
    %1283 = vmatpush.msra.mxu0 0.0
    %1284 = vmatpush.msra.mxu0 0.0
    %1285 = vmatpush.msra.mxu0 0.0
    %1286 = vmatpush.msra.mxu0 0.0
    %1287 = vmatpush.msra.mxu0 0.0
    %1288 = vmatpush.msra.mxu0 0.0
    %1289 = vmatpush.msra.mxu0 0.0
    %1290 = vmatpush.msra.mxu0 0.0
    %1291 = vmatpush.msra.mxu0 0.0
    %1292 = vmatpush.msra.mxu0 0.0
    %1293 = vmatpush.msra.mxu0 0.0
    %1294 = vmatpush.msra.mxu0 0.0
    %1295 = vmatpush.msra.mxu0 0.0
    %1296 = vmatpush.msra.mxu0 0.0
    %1297 = vmatpush.msra.mxu0 %v1045
    %1298 = vmatmul.f32.gmra.mxu0 %v1260
    %v1299 = vpop.f32.mrf.mxu0
    %v1300 = vadd.f32 0.0, %v1299
    %1301 = vdwg.mxu0
    %v1302 = vadd.f32 %v1256, %v1280
    %v1303 = vadd.f32 %v1257, %v1300
    %1304 = vrot.lane.b32.xlu0 %v1044, 127
    %v1305 = vpop.permute.xlu0 %1304
    %1306 = vrot.lane.b32.xlu0 %v1045, 127
    %v1307 = vpop.permute.xlu0 %1306
    %v1308 = vsel %vm309, %v1305, %v1307
    %v1309 = vsel %vm309, %v1307, %v1305
    %v1310 = vmul.f32 %v1308, %v312
    %v1311 = vmul.f32 %v1309, %v313
    %v1312 = vld [vmem:[%s316] sm:$0xff]
    %v1314 = vsel %vm55, %v1312, 0
    %1316 = vmatpush.msra.mxu0 0.0
    %1317 = vmatpush.msra.mxu0 0.0
    %1318 = vmatpush.msra.mxu0 0.0
    %1319 = vmatpush.msra.mxu0 0.0
    %1320 = vmatpush.msra.mxu0 0.0
    %1321 = vmatpush.msra.mxu0 0.0
    %1322 = vmatpush.msra.mxu0 0.0
    %1323 = vmatpush.msra.mxu0 0.0
    %1324 = vmatpush.msra.mxu0 0.0
    %1325 = vmatpush.msra.mxu0 0.0
    %1326 = vmatpush.msra.mxu0 0.0
    %1327 = vmatpush.msra.mxu0 0.0
    %1328 = vmatpush.msra.mxu0 0.0
    %1329 = vmatpush.msra.mxu0 0.0
    %1330 = vmatpush.msra.mxu0 0.0
    %1331 = vmatpush.msra.mxu0 %v1310
    %1332 = vmatmul.f32.gmra.mxu0 %v1314
    %v1333 = vpop.f32.mrf.mxu0
    %v1334 = vadd.f32 0.0, %v1333
    %1335 = vdwg.mxu0
    %1336 = vmatpush.msra.mxu0 0.0
    %1337 = vmatpush.msra.mxu0 0.0
    %1338 = vmatpush.msra.mxu0 0.0
    %1339 = vmatpush.msra.mxu0 0.0
    %1340 = vmatpush.msra.mxu0 0.0
    %1341 = vmatpush.msra.mxu0 0.0
    %1342 = vmatpush.msra.mxu0 0.0
    %1343 = vmatpush.msra.mxu0 0.0
    %1344 = vmatpush.msra.mxu0 0.0
    %1345 = vmatpush.msra.mxu0 0.0
    %1346 = vmatpush.msra.mxu0 0.0
    %1347 = vmatpush.msra.mxu0 0.0
    %1348 = vmatpush.msra.mxu0 0.0
    %1349 = vmatpush.msra.mxu0 0.0
    %1350 = vmatpush.msra.mxu0 0.0
    %1351 = vmatpush.msra.mxu0 %v1311
    %1352 = vmatmul.f32.gmra.mxu0 %v1314
    %v1353 = vpop.f32.mrf.mxu0
    %v1354 = vadd.f32 0.0, %v1353
    %1355 = vdwg.mxu0
    %v1356 = vadd.f32 %v1302, %v1334
    %v1357 = vadd.f32 %v1303, %v1354
    %1358 = vrot.lane.b32.xlu0 %v1044, 113
    %v1359 = vpop.permute.xlu0 %1358
    %1360 = vrot.lane.b32.xlu0 %v1045, 113
    %v1361 = vpop.permute.xlu0 %1360
    %v1362 = vsel %vm367, %v1359, %v1361
    %v1363 = vsel %vm367, %v1361, %v1359
    %v1364 = vmul.f32 %v1362, %v370
    %v1365 = vmul.f32 %v1363, %v371
    %v1366 = vld [vmem:[%s374] sm:$0xff]
    %v1368 = vsel %vm55, %v1366, 0
    %1370 = vmatpush.msra.mxu0 0.0
    %1371 = vmatpush.msra.mxu0 0.0
    %1372 = vmatpush.msra.mxu0 0.0
    %1373 = vmatpush.msra.mxu0 0.0
    %1374 = vmatpush.msra.mxu0 0.0
    %1375 = vmatpush.msra.mxu0 0.0
    %1376 = vmatpush.msra.mxu0 0.0
    %1377 = vmatpush.msra.mxu0 0.0
    %1378 = vmatpush.msra.mxu0 0.0
    %1379 = vmatpush.msra.mxu0 0.0
    %1380 = vmatpush.msra.mxu0 0.0
    %1381 = vmatpush.msra.mxu0 0.0
    %1382 = vmatpush.msra.mxu0 0.0
    %1383 = vmatpush.msra.mxu0 0.0
    %1384 = vmatpush.msra.mxu0 0.0
    %1385 = vmatpush.msra.mxu0 %v1364
    %1386 = vmatmul.f32.gmra.mxu0 %v1368
    %v1387 = vpop.f32.mrf.mxu0
    %v1388 = vadd.f32 0.0, %v1387
    %1389 = vdwg.mxu0
    %1390 = vmatpush.msra.mxu0 0.0
    %1391 = vmatpush.msra.mxu0 0.0
    %1392 = vmatpush.msra.mxu0 0.0
    %1393 = vmatpush.msra.mxu0 0.0
    %1394 = vmatpush.msra.mxu0 0.0
    %1395 = vmatpush.msra.mxu0 0.0
    %1396 = vmatpush.msra.mxu0 0.0
    %1397 = vmatpush.msra.mxu0 0.0
    %1398 = vmatpush.msra.mxu0 0.0
    %1399 = vmatpush.msra.mxu0 0.0
    %1400 = vmatpush.msra.mxu0 0.0
    %1401 = vmatpush.msra.mxu0 0.0
    %1402 = vmatpush.msra.mxu0 0.0
    %1403 = vmatpush.msra.mxu0 0.0
    %1404 = vmatpush.msra.mxu0 0.0
    %1405 = vmatpush.msra.mxu0 %v1365
    %1406 = vmatmul.f32.gmra.mxu0 %v1368
    %v1407 = vpop.f32.mrf.mxu0
    %v1408 = vadd.f32 0.0, %v1407
    %1409 = vdwg.mxu0
    %v1410 = vadd.f32 %v1356, %v1388
    %v1411 = vadd.f32 %v1357, %v1408
    %1412 = vrot.lane.b32.xlu0 %v1044, 112
    %v1413 = vpop.permute.xlu0 %1412
    %1414 = vrot.lane.b32.xlu0 %v1045, 112
    %v1415 = vpop.permute.xlu0 %1414
    %v1416 = vsel %vm425, %v1413, %v1415
    %v1417 = vsel %vm425, %v1415, %v1413
    %v1418 = vmul.f32 %v1416, %v428
    %v1419 = vmul.f32 %v1417, %v429
    %v1420 = vld [vmem:[%s432] sm:$0xff]
    %v1422 = vsel %vm55, %v1420, 0
    %1424 = vmatpush.msra.mxu0 0.0
    %1425 = vmatpush.msra.mxu0 0.0
    %1426 = vmatpush.msra.mxu0 0.0
    %1427 = vmatpush.msra.mxu0 0.0
    %1428 = vmatpush.msra.mxu0 0.0
    %1429 = vmatpush.msra.mxu0 0.0
    %1430 = vmatpush.msra.mxu0 0.0
    %1431 = vmatpush.msra.mxu0 0.0
    %1432 = vmatpush.msra.mxu0 0.0
    %1433 = vmatpush.msra.mxu0 0.0
    %1434 = vmatpush.msra.mxu0 0.0
    %1435 = vmatpush.msra.mxu0 0.0
    %1436 = vmatpush.msra.mxu0 0.0
    %1437 = vmatpush.msra.mxu0 0.0
    %1438 = vmatpush.msra.mxu0 0.0
    %1439 = vmatpush.msra.mxu0 %v1418
    %1440 = vmatmul.f32.gmra.mxu0 %v1422
    %v1441 = vpop.f32.mrf.mxu0
    %v1442 = vadd.f32 0.0, %v1441
    %1443 = vdwg.mxu0
    %1444 = vmatpush.msra.mxu0 0.0
    %1445 = vmatpush.msra.mxu0 0.0
    %1446 = vmatpush.msra.mxu0 0.0
    %1447 = vmatpush.msra.mxu0 0.0
    %1448 = vmatpush.msra.mxu0 0.0
    %1449 = vmatpush.msra.mxu0 0.0
    %1450 = vmatpush.msra.mxu0 0.0
    %1451 = vmatpush.msra.mxu0 0.0
    %1452 = vmatpush.msra.mxu0 0.0
    %1453 = vmatpush.msra.mxu0 0.0
    %1454 = vmatpush.msra.mxu0 0.0
    %1455 = vmatpush.msra.mxu0 0.0
    %1456 = vmatpush.msra.mxu0 0.0
    %1457 = vmatpush.msra.mxu0 0.0
    %1458 = vmatpush.msra.mxu0 0.0
    %1459 = vmatpush.msra.mxu0 %v1419
    %1460 = vmatmul.f32.gmra.mxu0 %v1422
    %v1461 = vpop.f32.mrf.mxu0
    %v1462 = vadd.f32 0.0, %v1461
    %1463 = vdwg.mxu0
    %v1464 = vadd.f32 %v1410, %v1442
    %v1465 = vadd.f32 %v1411, %v1462
    %1466 = vrot.lane.b32.xlu0 %v1044, 111
    %v1467 = vpop.permute.xlu0 %1466
    %1468 = vrot.lane.b32.xlu0 %v1045, 111
    %v1469 = vpop.permute.xlu0 %1468
    %v1470 = vsel %vm483, %v1467, %v1469
    %v1471 = vsel %vm483, %v1469, %v1467
    %v1472 = vmul.f32 %v1470, %v486
    %v1473 = vmul.f32 %v1471, %v487
    %v1474 = vld [vmem:[%s490] sm:$0xff]
    %v1476 = vsel %vm55, %v1474, 0
    %1478 = vmatpush.msra.mxu0 0.0
    %1479 = vmatpush.msra.mxu0 0.0
    %1480 = vmatpush.msra.mxu0 0.0
    %1481 = vmatpush.msra.mxu0 0.0
    %1482 = vmatpush.msra.mxu0 0.0
    %1483 = vmatpush.msra.mxu0 0.0
    %1484 = vmatpush.msra.mxu0 0.0
    %1485 = vmatpush.msra.mxu0 0.0
    %1486 = vmatpush.msra.mxu0 0.0
    %1487 = vmatpush.msra.mxu0 0.0
    %1488 = vmatpush.msra.mxu0 0.0
    %1489 = vmatpush.msra.mxu0 0.0
    %1490 = vmatpush.msra.mxu0 0.0
    %1491 = vmatpush.msra.mxu0 0.0
    %1492 = vmatpush.msra.mxu0 0.0
    %1493 = vmatpush.msra.mxu0 %v1472
    %1494 = vmatmul.f32.gmra.mxu0 %v1476
    %v1495 = vpop.f32.mrf.mxu0
    %v1496 = vadd.f32 0.0, %v1495
    %1497 = vdwg.mxu0
    %1498 = vmatpush.msra.mxu0 0.0
    %1499 = vmatpush.msra.mxu0 0.0
    %1500 = vmatpush.msra.mxu0 0.0
    %1501 = vmatpush.msra.mxu0 0.0
    %1502 = vmatpush.msra.mxu0 0.0
    %1503 = vmatpush.msra.mxu0 0.0
    %1504 = vmatpush.msra.mxu0 0.0
    %1505 = vmatpush.msra.mxu0 0.0
    %1506 = vmatpush.msra.mxu0 0.0
    %1507 = vmatpush.msra.mxu0 0.0
    %1508 = vmatpush.msra.mxu0 0.0
    %1509 = vmatpush.msra.mxu0 0.0
    %1510 = vmatpush.msra.mxu0 0.0
    %1511 = vmatpush.msra.mxu0 0.0
    %1512 = vmatpush.msra.mxu0 0.0
    %1513 = vmatpush.msra.mxu0 %v1473
    %1514 = vmatmul.f32.gmra.mxu0 %v1476
    %v1515 = vpop.f32.mrf.mxu0
    %v1516 = vadd.f32 0.0, %v1515
    %1517 = vdwg.mxu0
    %v1518 = vadd.f32 %v1464, %v1496
    %v1519 = vadd.f32 %v1465, %v1516
    %v1520 = vld [vmem:[%s3] sm:$0xff]
    %1522 = vset.pattern.permute.xlu0 0
    %1523 = vperm.xlu0 %1522, %v1520
    %v1524 = vpop.permute.xlu0 %1523
    %v1526 = vadd.f32 %v1518, %v1524
    %v1527 = vadd.f32 %v1519, %v1524
    %v1528 = vmax.f32 %v1526, 0.0
    %v1529 = vmax.f32 %v1527, 0.0
    %1530 = vrot.lane.b32.xlu0 %v1528, 17
    %v1531 = vpop.permute.xlu0 %1530
    %1532 = vrot.lane.b32.xlu0 %v1529, 17
    %v1533 = vpop.permute.xlu0 %1532
    %v1534 = vsel %vm34, %v1531, %v1533
    %v1535 = vsel %vm34, %v1533, %v1531
    %v1536 = vmul.f32 %v1535, %v37
    %v1537 = vmul.f32 %v1534, %v38
    %v1538 = vld [vmem:[%s4] sm:$0xff]
    %1539 = vrot.lane.b32.xlu0 %v1528, 16
    %v1540 = vpop.permute.xlu0 %1539
    %1541 = vrot.lane.b32.xlu0 %v1529, 16
    %v1542 = vpop.permute.xlu0 %1541
    %v1543 = vsel %vm46, %v1540, %v1542
    %v1544 = vsel %vm46, %v1542, %v1540
    %v1545 = vmul.f32 %v1544, %v49
    %v1546 = vmul.f32 %v1543, %v50
    %v1547 = vld [vmem:[%s564] sm:$0xff]
    %v1549 = vsel %vm55, %v1547, 0
    %1551 = vmatpush.msra.mxu0 0.0
    %1552 = vmatpush.msra.mxu0 0.0
    %1553 = vmatpush.msra.mxu0 0.0
    %1554 = vmatpush.msra.mxu0 0.0
    %1555 = vmatpush.msra.mxu0 0.0
    %1556 = vmatpush.msra.mxu0 0.0
    %1557 = vmatpush.msra.mxu0 0.0
    %1558 = vmatpush.msra.mxu0 0.0
    %1559 = vmatpush.msra.mxu0 0.0
    %1560 = vmatpush.msra.mxu0 0.0
    %1561 = vmatpush.msra.mxu0 0.0
    %1562 = vmatpush.msra.mxu0 0.0
    %1563 = vmatpush.msra.mxu0 0.0
    %1564 = vmatpush.msra.mxu0 0.0
    %1565 = vmatpush.msra.mxu0 0.0
    %1566 = vmatpush.msra.mxu0 %v1545
    %1567 = vmatmul.f32.gmra.mxu0 %v1549
    %v1568 = vpop.f32.mrf.mxu0
    %v1569 = vadd.f32 0.0, %v1568
    %1570 = vdwg.mxu0
    %1571 = vmatpush.msra.mxu0 0.0
    %1572 = vmatpush.msra.mxu0 0.0
    %1573 = vmatpush.msra.mxu0 0.0
    %1574 = vmatpush.msra.mxu0 0.0
    %1575 = vmatpush.msra.mxu0 0.0
    %1576 = vmatpush.msra.mxu0 0.0
    %1577 = vmatpush.msra.mxu0 0.0
    %1578 = vmatpush.msra.mxu0 0.0
    %1579 = vmatpush.msra.mxu0 0.0
    %1580 = vmatpush.msra.mxu0 0.0
    %1581 = vmatpush.msra.mxu0 0.0
    %1582 = vmatpush.msra.mxu0 0.0
    %1583 = vmatpush.msra.mxu0 0.0
    %1584 = vmatpush.msra.mxu0 0.0
    %1585 = vmatpush.msra.mxu0 0.0
    %1586 = vmatpush.msra.mxu0 %v1546
    %1587 = vmatmul.f32.gmra.mxu0 %v1549
    %v1588 = vpop.f32.mrf.mxu0
    %v1589 = vadd.f32 0.0, %v1588
    %1590 = vdwg.mxu0
    %v1592 = vsel %vm55, %v1538, 0
    %1594 = vmatpush.msra.mxu0 0.0
    %1595 = vmatpush.msra.mxu0 0.0
    %1596 = vmatpush.msra.mxu0 0.0
    %1597 = vmatpush.msra.mxu0 0.0
    %1598 = vmatpush.msra.mxu0 0.0
    %1599 = vmatpush.msra.mxu0 0.0
    %1600 = vmatpush.msra.mxu0 0.0
    %1601 = vmatpush.msra.mxu0 0.0
    %1602 = vmatpush.msra.mxu0 0.0
    %1603 = vmatpush.msra.mxu0 0.0
    %1604 = vmatpush.msra.mxu0 0.0
    %1605 = vmatpush.msra.mxu0 0.0
    %1606 = vmatpush.msra.mxu0 0.0
    %1607 = vmatpush.msra.mxu0 0.0
    %1608 = vmatpush.msra.mxu0 0.0
    %1609 = vmatpush.msra.mxu0 %v1536
    %1610 = vmatmul.f32.gmra.mxu0 %v1592
    %v1611 = vpop.f32.mrf.mxu0
    %v1612 = vadd.f32 %v1569, %v1611
    %1613 = vdwg.mxu0
    %1614 = vmatpush.msra.mxu0 0.0
    %1615 = vmatpush.msra.mxu0 0.0
    %1616 = vmatpush.msra.mxu0 0.0
    %1617 = vmatpush.msra.mxu0 0.0
    %1618 = vmatpush.msra.mxu0 0.0
    %1619 = vmatpush.msra.mxu0 0.0
    %1620 = vmatpush.msra.mxu0 0.0
    %1621 = vmatpush.msra.mxu0 0.0
    %1622 = vmatpush.msra.mxu0 0.0
    %1623 = vmatpush.msra.mxu0 0.0
    %1624 = vmatpush.msra.mxu0 0.0
    %1625 = vmatpush.msra.mxu0 0.0
    %1626 = vmatpush.msra.mxu0 0.0
    %1627 = vmatpush.msra.mxu0 0.0
    %1628 = vmatpush.msra.mxu0 0.0
    %1629 = vmatpush.msra.mxu0 %v1537
    %1630 = vmatmul.f32.gmra.mxu0 %v1592
    %v1631 = vpop.f32.mrf.mxu0
    %v1632 = vadd.f32 %v1589, %v1631
    %1633 = vdwg.mxu0
    %1634 = vrot.lane.b32.xlu0 %v1528, 15
    %v1635 = vpop.permute.xlu0 %1634
    %1636 = vrot.lane.b32.xlu0 %v1529, 15
    %v1637 = vpop.permute.xlu0 %1636
    %v1638 = vsel %vm146, %v1635, %v1637
    %v1639 = vsel %vm146, %v1637, %v1635
    %v1640 = vmul.f32 %v1639, %v149
    %v1641 = vmul.f32 %v1638, %v150
    %v1642 = vld [vmem:[%s660] sm:$0xff]
    %v1644 = vsel %vm55, %v1642, 0
    %1646 = vmatpush.msra.mxu0 0.0
    %1647 = vmatpush.msra.mxu0 0.0
    %1648 = vmatpush.msra.mxu0 0.0
    %1649 = vmatpush.msra.mxu0 0.0
    %1650 = vmatpush.msra.mxu0 0.0
    %1651 = vmatpush.msra.mxu0 0.0
    %1652 = vmatpush.msra.mxu0 0.0
    %1653 = vmatpush.msra.mxu0 0.0
    %1654 = vmatpush.msra.mxu0 0.0
    %1655 = vmatpush.msra.mxu0 0.0
    %1656 = vmatpush.msra.mxu0 0.0
    %1657 = vmatpush.msra.mxu0 0.0
    %1658 = vmatpush.msra.mxu0 0.0
    %1659 = vmatpush.msra.mxu0 0.0
    %1660 = vmatpush.msra.mxu0 0.0
    %1661 = vmatpush.msra.mxu0 %v1640
    %1662 = vmatmul.f32.gmra.mxu0 %v1644
    %v1663 = vpop.f32.mrf.mxu0
    %v1664 = vadd.f32 0.0, %v1663
    %1665 = vdwg.mxu0
    %1666 = vmatpush.msra.mxu0 0.0
    %1667 = vmatpush.msra.mxu0 0.0
    %1668 = vmatpush.msra.mxu0 0.0
    %1669 = vmatpush.msra.mxu0 0.0
    %1670 = vmatpush.msra.mxu0 0.0
    %1671 = vmatpush.msra.mxu0 0.0
    %1672 = vmatpush.msra.mxu0 0.0
    %1673 = vmatpush.msra.mxu0 0.0
    %1674 = vmatpush.msra.mxu0 0.0
    %1675 = vmatpush.msra.mxu0 0.0
    %1676 = vmatpush.msra.mxu0 0.0
    %1677 = vmatpush.msra.mxu0 0.0
    %1678 = vmatpush.msra.mxu0 0.0
    %1679 = vmatpush.msra.mxu0 0.0
    %1680 = vmatpush.msra.mxu0 0.0
    %1681 = vmatpush.msra.mxu0 %v1641
    %1682 = vmatmul.f32.gmra.mxu0 %v1644
    %v1683 = vpop.f32.mrf.mxu0
    %v1684 = vadd.f32 0.0, %v1683
    %1685 = vdwg.mxu0
    %v1686 = vadd.f32 %v1612, %v1664
    %v1687 = vadd.f32 %v1632, %v1684
    %1688 = vrot.lane.b32.xlu0 %v1528, 1
    %v1689 = vpop.permute.xlu0 %1688
    %1690 = vrot.lane.b32.xlu0 %v1529, 1
    %v1691 = vpop.permute.xlu0 %1690
    %v1692 = vsel %vm204, %v1689, %v1691
    %v1693 = vsel %vm204, %v1691, %v1689
    %v1694 = vmul.f32 %v1693, %v207
    %v1695 = vmul.f32 %v1692, %v208
    %v1696 = vld [vmem:[%s715] sm:$0xff]
    %v1698 = vsel %vm55, %v1696, 0
    %1700 = vmatpush.msra.mxu0 0.0
    %1701 = vmatpush.msra.mxu0 0.0
    %1702 = vmatpush.msra.mxu0 0.0
    %1703 = vmatpush.msra.mxu0 0.0
    %1704 = vmatpush.msra.mxu0 0.0
    %1705 = vmatpush.msra.mxu0 0.0
    %1706 = vmatpush.msra.mxu0 0.0
    %1707 = vmatpush.msra.mxu0 0.0
    %1708 = vmatpush.msra.mxu0 0.0
    %1709 = vmatpush.msra.mxu0 0.0
    %1710 = vmatpush.msra.mxu0 0.0
    %1711 = vmatpush.msra.mxu0 0.0
    %1712 = vmatpush.msra.mxu0 0.0
    %1713 = vmatpush.msra.mxu0 0.0
    %1714 = vmatpush.msra.mxu0 0.0
    %1715 = vmatpush.msra.mxu0 %v1694
    %1716 = vmatmul.f32.gmra.mxu0 %v1698
    %v1717 = vpop.f32.mrf.mxu0
    %v1718 = vadd.f32 0.0, %v1717
    %1719 = vdwg.mxu0
    %1720 = vmatpush.msra.mxu0 0.0
    %1721 = vmatpush.msra.mxu0 0.0
    %1722 = vmatpush.msra.mxu0 0.0
    %1723 = vmatpush.msra.mxu0 0.0
    %1724 = vmatpush.msra.mxu0 0.0
    %1725 = vmatpush.msra.mxu0 0.0
    %1726 = vmatpush.msra.mxu0 0.0
    %1727 = vmatpush.msra.mxu0 0.0
    %1728 = vmatpush.msra.mxu0 0.0
    %1729 = vmatpush.msra.mxu0 0.0
    %1730 = vmatpush.msra.mxu0 0.0
    %1731 = vmatpush.msra.mxu0 0.0
    %1732 = vmatpush.msra.mxu0 0.0
    %1733 = vmatpush.msra.mxu0 0.0
    %1734 = vmatpush.msra.mxu0 0.0
    %1735 = vmatpush.msra.mxu0 %v1695
    %1736 = vmatmul.f32.gmra.mxu0 %v1698
    %v1737 = vpop.f32.mrf.mxu0
    %v1738 = vadd.f32 0.0, %v1737
    %1739 = vdwg.mxu0
    %v1740 = vadd.f32 %v1686, %v1718
    %v1741 = vadd.f32 %v1687, %v1738
    %v1742 = vld [vmem:[%s762] sm:$0xff]
    %v1744 = vsel %vm55, %v1742, 0
    %1746 = vmatpush.msra.mxu0 0.0
    %1747 = vmatpush.msra.mxu0 0.0
    %1748 = vmatpush.msra.mxu0 0.0
    %1749 = vmatpush.msra.mxu0 0.0
    %1750 = vmatpush.msra.mxu0 0.0
    %1751 = vmatpush.msra.mxu0 0.0
    %1752 = vmatpush.msra.mxu0 0.0
    %1753 = vmatpush.msra.mxu0 0.0
    %1754 = vmatpush.msra.mxu0 0.0
    %1755 = vmatpush.msra.mxu0 0.0
    %1756 = vmatpush.msra.mxu0 0.0
    %1757 = vmatpush.msra.mxu0 0.0
    %1758 = vmatpush.msra.mxu0 0.0
    %1759 = vmatpush.msra.mxu0 0.0
    %1760 = vmatpush.msra.mxu0 0.0
    %1761 = vmatpush.msra.mxu0 %v1528
    %1762 = vmatmul.f32.gmra.mxu0 %v1744
    %v1763 = vpop.f32.mrf.mxu0
    %v1764 = vadd.f32 0.0, %v1763
    %1765 = vdwg.mxu0
    %1766 = vmatpush.msra.mxu0 0.0
    %1767 = vmatpush.msra.mxu0 0.0
    %1768 = vmatpush.msra.mxu0 0.0
    %1769 = vmatpush.msra.mxu0 0.0
    %1770 = vmatpush.msra.mxu0 0.0
    %1771 = vmatpush.msra.mxu0 0.0
    %1772 = vmatpush.msra.mxu0 0.0
    %1773 = vmatpush.msra.mxu0 0.0
    %1774 = vmatpush.msra.mxu0 0.0
    %1775 = vmatpush.msra.mxu0 0.0
    %1776 = vmatpush.msra.mxu0 0.0
    %1777 = vmatpush.msra.mxu0 0.0
    %1778 = vmatpush.msra.mxu0 0.0
    %1779 = vmatpush.msra.mxu0 0.0
    %1780 = vmatpush.msra.mxu0 0.0
    %1781 = vmatpush.msra.mxu0 %v1529
    %1782 = vmatmul.f32.gmra.mxu0 %v1744
    %v1783 = vpop.f32.mrf.mxu0
    %v1784 = vadd.f32 0.0, %v1783
    %1785 = vdwg.mxu0
    %v1786 = vadd.f32 %v1740, %v1764
    %v1787 = vadd.f32 %v1741, %v1784
    %1788 = vrot.lane.b32.xlu0 %v1528, 127
    %v1789 = vpop.permute.xlu0 %1788
    %1790 = vrot.lane.b32.xlu0 %v1529, 127
    %v1791 = vpop.permute.xlu0 %1790
    %v1792 = vsel %vm309, %v1789, %v1791
    %v1793 = vsel %vm309, %v1791, %v1789
    %v1794 = vmul.f32 %v1792, %v312
    %v1795 = vmul.f32 %v1793, %v313
    %v1796 = vld [vmem:[%s817] sm:$0xff]
    %v1798 = vsel %vm55, %v1796, 0
    %1800 = vmatpush.msra.mxu0 0.0
    %1801 = vmatpush.msra.mxu0 0.0
    %1802 = vmatpush.msra.mxu0 0.0
    %1803 = vmatpush.msra.mxu0 0.0
    %1804 = vmatpush.msra.mxu0 0.0
    %1805 = vmatpush.msra.mxu0 0.0
    %1806 = vmatpush.msra.mxu0 0.0
    %1807 = vmatpush.msra.mxu0 0.0
    %1808 = vmatpush.msra.mxu0 0.0
    %1809 = vmatpush.msra.mxu0 0.0
    %1810 = vmatpush.msra.mxu0 0.0
    %1811 = vmatpush.msra.mxu0 0.0
    %1812 = vmatpush.msra.mxu0 0.0
    %1813 = vmatpush.msra.mxu0 0.0
    %1814 = vmatpush.msra.mxu0 0.0
    %1815 = vmatpush.msra.mxu0 %v1794
    %1816 = vmatmul.f32.gmra.mxu0 %v1798
    %v1817 = vpop.f32.mrf.mxu0
    %v1818 = vadd.f32 0.0, %v1817
    %1819 = vdwg.mxu0
    %1820 = vmatpush.msra.mxu0 0.0
    %1821 = vmatpush.msra.mxu0 0.0
    %1822 = vmatpush.msra.mxu0 0.0
    %1823 = vmatpush.msra.mxu0 0.0
    %1824 = vmatpush.msra.mxu0 0.0
    %1825 = vmatpush.msra.mxu0 0.0
    %1826 = vmatpush.msra.mxu0 0.0
    %1827 = vmatpush.msra.mxu0 0.0
    %1828 = vmatpush.msra.mxu0 0.0
    %1829 = vmatpush.msra.mxu0 0.0
    %1830 = vmatpush.msra.mxu0 0.0
    %1831 = vmatpush.msra.mxu0 0.0
    %1832 = vmatpush.msra.mxu0 0.0
    %1833 = vmatpush.msra.mxu0 0.0
    %1834 = vmatpush.msra.mxu0 0.0
    %1835 = vmatpush.msra.mxu0 %v1795
    %1836 = vmatmul.f32.gmra.mxu0 %v1798
    %v1837 = vpop.f32.mrf.mxu0
    %v1838 = vadd.f32 0.0, %v1837
    %1839 = vdwg.mxu0
    %v1840 = vadd.f32 %v1786, %v1818
    %v1841 = vadd.f32 %v1787, %v1838
    %1842 = vrot.lane.b32.xlu0 %v1528, 113
    %v1843 = vpop.permute.xlu0 %1842
    %1844 = vrot.lane.b32.xlu0 %v1529, 113
    %v1845 = vpop.permute.xlu0 %1844
    %v1846 = vsel %vm367, %v1843, %v1845
    %v1847 = vsel %vm367, %v1845, %v1843
    %v1848 = vmul.f32 %v1846, %v370
    %v1849 = vmul.f32 %v1847, %v371
    %v1850 = vld [vmem:[%s872] sm:$0xff]
    %v1852 = vsel %vm55, %v1850, 0
    %1854 = vmatpush.msra.mxu0 0.0
    %1855 = vmatpush.msra.mxu0 0.0
    %1856 = vmatpush.msra.mxu0 0.0
    %1857 = vmatpush.msra.mxu0 0.0
    %1858 = vmatpush.msra.mxu0 0.0
    %1859 = vmatpush.msra.mxu0 0.0
    %1860 = vmatpush.msra.mxu0 0.0
    %1861 = vmatpush.msra.mxu0 0.0
    %1862 = vmatpush.msra.mxu0 0.0
    %1863 = vmatpush.msra.mxu0 0.0
    %1864 = vmatpush.msra.mxu0 0.0
    %1865 = vmatpush.msra.mxu0 0.0
    %1866 = vmatpush.msra.mxu0 0.0
    %1867 = vmatpush.msra.mxu0 0.0
    %1868 = vmatpush.msra.mxu0 0.0
    %1869 = vmatpush.msra.mxu0 %v1848
    %1870 = vmatmul.f32.gmra.mxu0 %v1852
    %v1871 = vpop.f32.mrf.mxu0
    %v1872 = vadd.f32 0.0, %v1871
    %1873 = vdwg.mxu0
    %1874 = vmatpush.msra.mxu0 0.0
    %1875 = vmatpush.msra.mxu0 0.0
    %1876 = vmatpush.msra.mxu0 0.0
    %1877 = vmatpush.msra.mxu0 0.0
    %1878 = vmatpush.msra.mxu0 0.0
    %1879 = vmatpush.msra.mxu0 0.0
    %1880 = vmatpush.msra.mxu0 0.0
    %1881 = vmatpush.msra.mxu0 0.0
    %1882 = vmatpush.msra.mxu0 0.0
    %1883 = vmatpush.msra.mxu0 0.0
    %1884 = vmatpush.msra.mxu0 0.0
    %1885 = vmatpush.msra.mxu0 0.0
    %1886 = vmatpush.msra.mxu0 0.0
    %1887 = vmatpush.msra.mxu0 0.0
    %1888 = vmatpush.msra.mxu0 0.0
    %1889 = vmatpush.msra.mxu0 %v1849
    %1890 = vmatmul.f32.gmra.mxu0 %v1852
    %v1891 = vpop.f32.mrf.mxu0
    %v1892 = vadd.f32 0.0, %v1891
    %1893 = vdwg.mxu0
    %v1894 = vadd.f32 %v1840, %v1872
    %v1895 = vadd.f32 %v1841, %v1892
    %1896 = vrot.lane.b32.xlu0 %v1528, 112
    %v1897 = vpop.permute.xlu0 %1896
    %1898 = vrot.lane.b32.xlu0 %v1529, 112
    %v1899 = vpop.permute.xlu0 %1898
    %v1900 = vsel %vm425, %v1897, %v1899
    %v1901 = vsel %vm425, %v1899, %v1897
    %v1902 = vmul.f32 %v1900, %v428
    %v1903 = vmul.f32 %v1901, %v429
    %v1904 = vld [vmem:[%s927] sm:$0xff]
    %v1906 = vsel %vm55, %v1904, 0
    %1908 = vmatpush.msra.mxu0 0.0
    %1909 = vmatpush.msra.mxu0 0.0
    %1910 = vmatpush.msra.mxu0 0.0
    %1911 = vmatpush.msra.mxu0 0.0
    %1912 = vmatpush.msra.mxu0 0.0
    %1913 = vmatpush.msra.mxu0 0.0
    %1914 = vmatpush.msra.mxu0 0.0
    %1915 = vmatpush.msra.mxu0 0.0
    %1916 = vmatpush.msra.mxu0 0.0
    %1917 = vmatpush.msra.mxu0 0.0
    %1918 = vmatpush.msra.mxu0 0.0
    %1919 = vmatpush.msra.mxu0 0.0
    %1920 = vmatpush.msra.mxu0 0.0
    %1921 = vmatpush.msra.mxu0 0.0
    %1922 = vmatpush.msra.mxu0 0.0
    %1923 = vmatpush.msra.mxu0 %v1902
    %1924 = vmatmul.f32.gmra.mxu0 %v1906
    %v1925 = vpop.f32.mrf.mxu0
    %v1926 = vadd.f32 0.0, %v1925
    %1927 = vdwg.mxu0
    %1928 = vmatpush.msra.mxu0 0.0
    %1929 = vmatpush.msra.mxu0 0.0
    %1930 = vmatpush.msra.mxu0 0.0
    %1931 = vmatpush.msra.mxu0 0.0
    %1932 = vmatpush.msra.mxu0 0.0
    %1933 = vmatpush.msra.mxu0 0.0
    %1934 = vmatpush.msra.mxu0 0.0
    %1935 = vmatpush.msra.mxu0 0.0
    %1936 = vmatpush.msra.mxu0 0.0
    %1937 = vmatpush.msra.mxu0 0.0
    %1938 = vmatpush.msra.mxu0 0.0
    %1939 = vmatpush.msra.mxu0 0.0
    %1940 = vmatpush.msra.mxu0 0.0
    %1941 = vmatpush.msra.mxu0 0.0
    %1942 = vmatpush.msra.mxu0 0.0
    %1943 = vmatpush.msra.mxu0 %v1903
    %1944 = vmatmul.f32.gmra.mxu0 %v1906
    %v1945 = vpop.f32.mrf.mxu0
    %v1946 = vadd.f32 0.0, %v1945
    %1947 = vdwg.mxu0
    %v1948 = vadd.f32 %v1894, %v1926
    %v1949 = vadd.f32 %v1895, %v1946
    %1950 = vrot.lane.b32.xlu0 %v1528, 111
    %v1951 = vpop.permute.xlu0 %1950
    %1952 = vrot.lane.b32.xlu0 %v1529, 111
    %v1953 = vpop.permute.xlu0 %1952
    %v1954 = vsel %vm483, %v1951, %v1953
    %v1955 = vsel %vm483, %v1953, %v1951
    %v1956 = vmul.f32 %v1954, %v486
    %v1957 = vmul.f32 %v1955, %v487
    %v1958 = vld [vmem:[%s982] sm:$0xff]
    %v1960 = vsel %vm55, %v1958, 0
    %1962 = vmatpush.msra.mxu0 0.0
    %1963 = vmatpush.msra.mxu0 0.0
    %1964 = vmatpush.msra.mxu0 0.0
    %1965 = vmatpush.msra.mxu0 0.0
    %1966 = vmatpush.msra.mxu0 0.0
    %1967 = vmatpush.msra.mxu0 0.0
    %1968 = vmatpush.msra.mxu0 0.0
    %1969 = vmatpush.msra.mxu0 0.0
    %1970 = vmatpush.msra.mxu0 0.0
    %1971 = vmatpush.msra.mxu0 0.0
    %1972 = vmatpush.msra.mxu0 0.0
    %1973 = vmatpush.msra.mxu0 0.0
    %1974 = vmatpush.msra.mxu0 0.0
    %1975 = vmatpush.msra.mxu0 0.0
    %1976 = vmatpush.msra.mxu0 0.0
    %1977 = vmatpush.msra.mxu0 %v1956
    %1978 = vmatmul.f32.gmra.mxu0 %v1960
    %v1979 = vpop.f32.mrf.mxu0
    %v1980 = vadd.f32 0.0, %v1979
    %1981 = vdwg.mxu0
    %1982 = vmatpush.msra.mxu0 0.0
    %1983 = vmatpush.msra.mxu0 0.0
    %1984 = vmatpush.msra.mxu0 0.0
    %1985 = vmatpush.msra.mxu0 0.0
    %1986 = vmatpush.msra.mxu0 0.0
    %1987 = vmatpush.msra.mxu0 0.0
    %1988 = vmatpush.msra.mxu0 0.0
    %1989 = vmatpush.msra.mxu0 0.0
    %1990 = vmatpush.msra.mxu0 0.0
    %1991 = vmatpush.msra.mxu0 0.0
    %1992 = vmatpush.msra.mxu0 0.0
    %1993 = vmatpush.msra.mxu0 0.0
    %1994 = vmatpush.msra.mxu0 0.0
    %1995 = vmatpush.msra.mxu0 0.0
    %1996 = vmatpush.msra.mxu0 0.0
    %1997 = vmatpush.msra.mxu0 %v1957
    %1998 = vmatmul.f32.gmra.mxu0 %v1960
    %v1999 = vpop.f32.mrf.mxu0
    %v2000 = vadd.f32 0.0, %v1999
    %2001 = vdwg.mxu0
    %v2002 = vadd.f32 %v1948, %v1980
    %v2003 = vadd.f32 %v1949, %v2000
    %v2004 = vld [vmem:[%s5] sm:$0xff]
    %2006 = vset.pattern.permute.xlu0 0
    %2007 = vperm.xlu0 %2006, %v2004
    %v2008 = vpop.permute.xlu0 %2007
    %v2010 = vadd.f32 %v2002, %v2008
    %v2011 = vadd.f32 %v2003, %v2008
    %v2012 = vadd.f32 %v2010, %v1044
    %v2013 = vadd.f32 %v2011, %v1045
    %v2014 = vmax.f32 %v2012, 0.0
    %v2015 = vmax.f32 %v2013, 0.0
    %s2016 = scalar_lea.vmem [#allocation2], 16
    %2017 = vst [vmem:[%s2016] sm:$0xff] %v2014
    %2018 = vst [vmem:[%s2016 + $0x8] sm:$0xff] %v2015
    // Predicated region
    $region26: #{tpu_custom_call.1} parent=1 // pred_check
      _
    $region27: #{tpu_custom_call.1} parent=1 // pred_check_branch
      %2020 = sbr.rel (0) target = $region29
    $region28: #{tpu_custom_call.1} parent=1 // pred_region
      %2022 = vsyncadd [#allocation3], 0
      %s2023 = sshll.u32 [#allocation2], 4
      %s2024 = int_to_ptr.vmem [resolvable:$true] %s2023
      %s2025 = sshll.u32 %s6, 4
      %s2026 = int_to_ptr.hbm [resolvable:$true] %s2025
      %2031 = dma.vmem_to_hbm [thread:$0]  %s2024, 512, %s2026, [#allocation3], 256, 256, 16
    $region29: #{tpu_custom_call.1} parent=1 // pred_fallthru
      _
    // Predicated region
    $region30: #{tpu_custom_call.1} parent=1 // pred_check
      _
    $region31: #{tpu_custom_call.1} parent=1 // pred_check_branch
      %2033 = sbr.rel (0) target = $region33
    $region32: #{tpu_custom_call.1} parent=1 // pred_region
      %2035 = dma.done [#allocation3], 512
    $region33: #{tpu_custom_call.1} parent=1 // pred_fallthru
      _
    %2036 = vsyncpa [#allocation3], 1

</llo_original>
